<compile_context>
chip_gen: v6e
topology: v6e:2x2x1
jax: 0.10.0
libtpu: 0.0.40
codegen_flags: <defaults>
</compile_context>

<pallas_src>
import jax
import jax.numpy as jnp
from jax.experimental import pallas as pl
from jax.experimental.pallas import tpu as pltpu


HIDDEN = 256
CLASSES = 2
CLASSES_PAD = 128        # lane-dense padded logits width (sliced back to 2 in the wrapper)
SINGLE_SHOT_MAX_F = 16384  # up to here the whole reduction is one grid step
K_TILE_LARGE = 4096        # reduction tile for very large F (fits default scoped VMEM)


def _round_up(n, m):
    return (n + m - 1) // m * m


def _padded_f(F):
    """Padded reduction length and the K tile used for it."""
    if F <= SINGLE_SHOT_MAX_F:
        f_pad = _round_up(max(F, 128), 128)
        return f_pad, f_pad              # single shot
    f_pad = _round_up(F, K_TILE_LARGE)
    return f_pad, K_TILE_LARGE


def prepare_params(w1, b1, w2, b2):
    """One-time (outside the per-call forward) padding + bf16 cast of the weights.

    w1: [F, 256], b1: [256], w2: [256, 2], b2: [2]  (any float dtype)
    Returns (w1_p bf16 [F_pad, 256], b1_p f32 [1, 256],
             w2_p bf16 [256, 128],  b2_p f32 [1, 128]).
    """
    F = w1.shape[0]
    f_pad, _ = _padded_f(F)
    w1_bf = w1.astype(jnp.bfloat16)
    if f_pad != F:
        w1_p = jnp.zeros((f_pad, HIDDEN), jnp.bfloat16).at[:F, :].set(w1_bf)
    else:
        w1_p = w1_bf
    b1_p = b1.reshape(1, HIDDEN).astype(jnp.float32)
    w2_p = jnp.zeros((HIDDEN, CLASSES_PAD), jnp.bfloat16).at[:, :CLASSES].set(
        w2.astype(jnp.bfloat16))
    b2_p = jnp.zeros((1, CLASSES_PAD), jnp.float32).at[:, :CLASSES].set(
        b2.astype(jnp.float32))
    return w1_p, b1_p, w2_p, b2_p


def _mlp1_kernel(x_ref, w1_ref, b1_ref, w2_ref, b2_ref, h_ref, y_ref):
    k = pl.program_id(1)

    @pl.when(k == 0)
    def _():
        h_ref[...] = jnp.zeros_like(h_ref)

    # bf16 x bf16 -> f32 accumulate directly into the resident h output block.
    h_ref[...] += jnp.dot(
        x_ref[...].astype(jnp.bfloat16), w1_ref[...],
        preferred_element_type=jnp.float32,
    )

    @pl.when(k == pl.num_programs(1) - 1)
    def _():
        h = h_ref[...] + b1_ref[...]                      # f32 bias add (VPU)
        h_ref[...] = h
        # Tiny second linear: bf16 x bf16 on the MXU, f32 accumulate, f32 bias.
        y = jnp.dot(h.astype(jnp.bfloat16), w2_ref[...],
                    preferred_element_type=jnp.float32) + b2_ref[...]
        y_ref[...] = y


@jax.jit
def mlp1_forward(x, w1_p, b1_p, w2_p, b2_p):
    """x: [B, F]; prepared params from prepare_params().

    Returns (h [B, 256], y [B, 2]) in x.dtype, matching the PyTorch forward.
    """
    B, F = x.shape
    out_dtype = x.dtype

    f_pad = w1_p.shape[0]
    k_tile = f_pad if f_pad <= SINGLE_SHOT_MAX_F else K_TILE_LARGE
    n_k = f_pad // k_tile

    # Batch padding: multiple of 16 (bf16 LHS packs 16 rows per vreg sublane group).
    b_pad = _round_up(max(B, 1), 16)
    if b_pad <= 256:
        b_tile = b_pad
    else:
        b_tile = 256
        b_pad = _round_up(b_pad, b_tile)
    n_b = b_pad // b_tile

    if (b_pad, f_pad) != (B, F):
        x_p = jnp.zeros((b_pad, f_pad), x.dtype).at[:B, :F].set(x)
    else:
        x_p = x

    flops = 2 * b_pad * f_pad * HIDDEN + 2 * b_pad * HIDDEN * CLASSES_PAD
    bytes_accessed = (
        x_p.size * x_p.dtype.itemsize
        + w1_p.size * 2 + b1_p.size * 4
        + w2_p.size * 2 + b2_p.size * 4
        + b_pad * HIDDEN * 4 + b_pad * CLASSES_PAD * 4
    )

    h_pad, y_pad = pl.pallas_call(
        _mlp1_kernel,
        out_shape=(
            jax.ShapeDtypeStruct((b_pad, HIDDEN), jnp.float32),
            jax.ShapeDtypeStruct((b_pad, CLASSES_PAD), jnp.float32),
        ),
        grid_spec=pltpu.PrefetchScalarGridSpec(
            num_scalar_prefetch=0,
            grid=(n_b, n_k),
            in_specs=[
                pl.BlockSpec((b_tile, k_tile), lambda b, k: (b, k)),       # x
                pl.BlockSpec((k_tile, HIDDEN), lambda b, k: (k, 0)),       # W1
                pl.BlockSpec((1, HIDDEN), lambda b, k: (0, 0)),            # b1
                pl.BlockSpec((HIDDEN, CLASSES_PAD), lambda b, k: (0, 0)),  # W2
                pl.BlockSpec((1, CLASSES_PAD), lambda b, k: (0, 0)),       # b2
            ],
            out_specs=(
                pl.BlockSpec((b_tile, HIDDEN), lambda b, k: (b, 0)),        # h
                pl.BlockSpec((b_tile, CLASSES_PAD), lambda b, k: (b, 0)),   # y (padded)
            ),
        ),
        compiler_params=pltpu.CompilerParams(
            dimension_semantics=("parallel", "arbitrary"),
        ),
        cost_estimate=pl.CostEstimate(
            flops=flops, transcendentals=0, bytes_accessed=bytes_accessed
        ),
    )(x_p, w1_p, b1_p, w2_p, b2_p)

    h = h_pad[:B, :].astype(out_dtype)
    y = y_pad[:B, :CLASSES].astype(out_dtype)
    return h, y


def init_params(key, in_features):
    """Deterministic init mimicking PyTorch nn.Linear default (uniform +/- 1/sqrt(fan_in))."""
    k1, k2, k3, k4 = jax.random.split(key, 4)
    bound1 = 1.0 / (in_features ** 0.5)
    w1 = jax.random.uniform(k1, (in_features, HIDDEN), jnp.float32, -bound1, bound1)
    b1 = jax.random.uniform(k2, (HIDDEN,), jnp.float32, -bound1, bound1)
    bound2 = 1.0 / (HIDDEN ** 0.5)
    w2 = jax.random.uniform(k3, (HIDDEN, CLASSES), jnp.float32, -bound2, bound2)
    b2 = jax.random.uniform(k4, (CLASSES,), jnp.float32, -bound2, bound2)
    return w1, b1, w2, b2


if __name__ == "__main__":
    key = jax.random.PRNGKey(0)
    k_x, k_p = jax.random.split(key)

    B = 8
    IN_FEATURES = 1500  # module default in_features

    x = jax.random.normal(k_x, (B, IN_FEATURES), jnp.float32)
    w1, b1, w2, b2 = init_params(k_p, IN_FEATURES)

    # One-time weight preparation (padding + bf16 cast), done outside the forward.
    w1_p, b1_p, w2_p, b2_p = prepare_params(w1, b1, w2, b2)
    jax.block_until_ready((w1_p, b1_p, w2_p, b2_p))

    h, y = mlp1_forward(x, w1_p, b1_p, w2_p, b2_p)
    jax.block_until_ready((h, y))

    assert h.shape == (B, HIDDEN) and y.shape == (B, CLASSES)

    # Precision-matched reference (bf16 operands, f32 accumulation) -- tight check.
    h_ref_bf = jnp.dot(x.astype(jnp.bfloat16), w1.astype(jnp.bfloat16),
                       preferred_element_type=jnp.float32) + b1
    y_ref_bf = jnp.dot(h_ref_bf.astype(jnp.bfloat16), w2.astype(jnp.bfloat16),
                       preferred_element_type=jnp.float32) + b2
    assert jnp.allclose(h, h_ref_bf, atol=2e-3, rtol=2e-3)
    assert jnp.allclose(y, y_ref_bf, atol=2e-3, rtol=2e-3)

    # Full-f32 reference -- loose check (bf16 weight/input quantization error).
    h_ref = x @ w1 + b1
    y_ref = h_ref @ w2 + b2
    assert jnp.allclose(h, h_ref, atol=5e-2, rtol=5e-2)
    assert jnp.allclose(y, y_ref, atol=5e-2, rtol=5e-2)

    print("KERNEL_OK")
</pallas_src>

<mosaic_0001>
module attributes {stable_mosaic.version = 11 : i64} {
  func.func @_mlp1_kernel(%arg0: i32, %arg1: i32, %arg2: memref<16x1536xf32, #tpu.memory_space<vmem>>, %arg3: memref<1536x256xbf16, #tpu.memory_space<vmem>>, %arg4: memref<1x256xf32, #tpu.memory_space<vmem>>, %arg5: memref<256x128xbf16, #tpu.memory_space<vmem>>, %arg6: memref<1x128xf32, #tpu.memory_space<vmem>>, %arg7: memref<16x256xf32, #tpu.memory_space<vmem>>, %arg8: memref<16x128xf32, #tpu.memory_space<vmem>>) attributes {dimension_semantics = [#tpu.dimension_semantics<parallel>, #tpu.dimension_semantics<arbitrary>], iteration_bounds = array<i64: 1, 1>, scalar_prefetch = 0 : i64, scratch_operands = 0 : i64, tpu.core_type = #tpu.core_type<tc>, window_params = [{transform_indices = @transform_0, window_bounds = array<i64: 16, 1536>}, {transform_indices = @transform_1, window_bounds = array<i64: 1536, 256>}, {pipeline_mode = #tpu.pipeline_mode<synchronous>, transform_indices = @transform_2, window_bounds = array<i64: 1, 256>}, {pipeline_mode = #tpu.pipeline_mode<synchronous>, transform_indices = @transform_3, window_bounds = array<i64: 256, 128>}, {pipeline_mode = #tpu.pipeline_mode<synchronous>, transform_indices = @transform_4, window_bounds = array<i64: 1, 128>}, {transform_indices = @transform_5, window_bounds = array<i64: 16, 256>}, {transform_indices = @transform_6, window_bounds = array<i64: 16, 128>}]} {
    %c0_i32 = arith.constant 0 : i32
    %0 = arith.cmpi eq, %arg1, %c0_i32 : i32
    %1 = arith.extui %0 : i1 to i32
    %c0_i32_0 = arith.constant 0 : i32
    %2 = arith.cmpi ne, %1, %c0_i32_0 : i32
    scf.if %2 {
      %cst_10 = arith.constant 0.000000e+00 : f32
      %13 = vector.broadcast %cst_10 : f32 to vector<16x256xf32>
      %c0_11 = arith.constant 0 : index
      %c0_12 = arith.constant 0 : index
      %14 = vector.load %arg7[%c0_11, %c0_12] : memref<16x256xf32, #tpu.memory_space<vmem>>, vector<16x256xf32>
      tpu.vector_store %arg7[%c0_11, %c0_12], %13 {strides = array<i32>} : memref<16x256xf32, #tpu.memory_space<vmem>>, vector<16x256xf32>,
    } else {
    }
    %c0 = arith.constant 0 : index
    %c0_1 = arith.constant 0 : index
    %3 = vector.load %arg7[%c0, %c0_1] : memref<16x256xf32, #tpu.memory_space<vmem>>, vector<16x256xf32>
    %c0_2 = arith.constant 0 : index
    %c0_3 = arith.constant 0 : index
    %4 = vector.load %arg2[%c0_2, %c0_3] : memref<16x1536xf32, #tpu.memory_space<vmem>>, vector<16x1536xf32>
    %5 = arith.truncf %4 : vector<16x1536xf32> to vector<16x1536xbf16>
    %c0_4 = arith.constant 0 : index
    %c0_5 = arith.constant 0 : index
    %6 = vector.load %arg3[%c0_4, %c0_5] : memref<1536x256xbf16, #tpu.memory_space<vmem>>, vector<1536x256xbf16>
    %cst = arith.constant dense<0.000000e+00> : vector<16x256xf32>
    %7 = tpu.matmul %5, %6, %cst {dimension_numbers = #tpu.dot_dimension_numbers<[1], [0], [0], [1], [0, 0, 1, 1], [], []>} : vector<16x1536xbf16>, vector<1536x256xbf16>, vector<16x256xf32> -> vector<16x256xf32>
    %8 = arith.addf %3, %7 : vector<16x256xf32>
    %c0_6 = arith.constant 0 : index
    %c0_7 = arith.constant 0 : index
    %9 = vector.load %arg7[%c0_6, %c0_7] : memref<16x256xf32, #tpu.memory_space<vmem>>, vector<16x256xf32>
    tpu.vector_store %arg7[%c0_6, %c0_7], %8 {strides = array<i32>} : memref<16x256xf32, #tpu.memory_space<vmem>>, vector<16x256xf32>,
    %c0_i32_8 = arith.constant 0 : i32
    %10 = arith.cmpi eq, %arg1, %c0_i32_8 : i32
    %11 = arith.extui %10 : i1 to i32
    %c0_i32_9 = arith.constant 0 : i32
    %12 = arith.cmpi ne, %11, %c0_i32_9 : i32
    scf.if %12 {
      %c0_10 = arith.constant 0 : index
      %c0_11 = arith.constant 0 : index
      %13 = vector.load %arg7[%c0_10, %c0_11] : memref<16x256xf32, #tpu.memory_space<vmem>>, vector<16x256xf32>
      %c0_12 = arith.constant 0 : index
      %c0_13 = arith.constant 0 : index
      %14 = vector.load %arg4[%c0_12, %c0_13] : memref<1x256xf32, #tpu.memory_space<vmem>>, vector<1x256xf32>
      %15 = vector.broadcast %14 : vector<1x256xf32> to vector<16x256xf32>
      %16 = arith.addf %13, %15 : vector<16x256xf32>
      %c0_14 = arith.constant 0 : index
      %c0_15 = arith.constant 0 : index
      %17 = vector.load %arg7[%c0_14, %c0_15] : memref<16x256xf32, #tpu.memory_space<vmem>>, vector<16x256xf32>
      tpu.vector_store %arg7[%c0_14, %c0_15], %16 {strides = array<i32>} : memref<16x256xf32, #tpu.memory_space<vmem>>, vector<16x256xf32>,
      %18 = arith.truncf %16 : vector<16x256xf32> to vector<16x256xbf16>
      %c0_16 = arith.constant 0 : index
      %c0_17 = arith.constant 0 : index
      %19 = vector.load %arg5[%c0_16, %c0_17] : memref<256x128xbf16, #tpu.memory_space<vmem>>, vector<256x128xbf16>
      %cst_18 = arith.constant dense<0.000000e+00> : vector<16x128xf32>
      %20 = tpu.matmul %18, %19, %cst_18 {dimension_numbers = #tpu.dot_dimension_numbers<[1], [0], [0], [1], [0, 0, 1, 1], [], []>} : vector<16x256xbf16>, vector<256x128xbf16>, vector<16x128xf32> -> vector<16x128xf32>
      %c0_19 = arith.constant 0 : index
      %c0_20 = arith.constant 0 : index
      %21 = vector.load %arg6[%c0_19, %c0_20] : memref<1x128xf32, #tpu.memory_space<vmem>>, vector<1x128xf32>
      %22 = vector.broadcast %21 : vector<1x128xf32> to vector<16x128xf32>
      %23 = arith.addf %20, %22 : vector<16x128xf32>
      %c0_21 = arith.constant 0 : index
      %c0_22 = arith.constant 0 : index
      %24 = vector.load %arg8[%c0_21, %c0_22] : memref<16x128xf32, #tpu.memory_space<vmem>>, vector<16x128xf32>
      tpu.vector_store %arg8[%c0_21, %c0_22], %23 {strides = array<i32>} : memref<16x128xf32, #tpu.memory_space<vmem>>, vector<16x128xf32>,
    } else {
    }
    return
  }
  func.func @transform_0(%arg0: i32, %arg1: i32) -> (i32, i32) {
    %c0_i32 = arith.constant 0 : i32
    return %arg0, %arg1 : i32, i32
  }
  func.func @transform_1(%arg0: i32, %arg1: i32) -> (i32, i32) {
    %c0_i32 = arith.constant 0 : i32
    %c0_i32_0 = arith.constant 0 : i32
    return %arg1, %c0_i32 : i32, i32
  }
  func.func @transform_2(%arg0: i32, %arg1: i32) -> (i32, i32) {
    %c0_i32 = arith.constant 0 : i32
    %c0_i32_0 = arith.constant 0 : i32
    %c0_i32_1 = arith.constant 0 : i32
    return %c0_i32, %c0_i32_0 : i32, i32
  }
  func.func @transform_3(%arg0: i32, %arg1: i32) -> (i32, i32) {
    %c0_i32 = arith.constant 0 : i32
    %c0_i32_0 = arith.constant 0 : i32
    %c0_i32_1 = arith.constant 0 : i32
    return %c0_i32, %c0_i32_0 : i32, i32
  }
  func.func @transform_4(%arg0: i32, %arg1: i32) -> (i32, i32) {
    %c0_i32 = arith.constant 0 : i32
    %c0_i32_0 = arith.constant 0 : i32
    %c0_i32_1 = arith.constant 0 : i32
    return %c0_i32, %c0_i32_0 : i32, i32
  }
  func.func @transform_5(%arg0: i32, %arg1: i32) -> (i32, i32) {
    %c0_i32 = arith.constant 0 : i32
    %c0_i32_0 = arith.constant 0 : i32
    return %arg0, %c0_i32 : i32, i32
  }
  func.func @transform_6(%arg0: i32, %arg1: i32) -> (i32, i32) {
    %c0_i32 = arith.constant 0 : i32
    %c0_i32_0 = arith.constant 0 : i32
    return %arg0, %c0_i32 : i32, i32
  }
}

</mosaic_0001>

<llo_original>
// kernel: mlp1_forward.1
$region0: #{mlp1_forward.1}
  #allocation0 [shape = 'u32[]', space=smem, size = 0x4, offset = 0x4, fixed_abs, tag = 'smem constant byte address 0x4 - core index']
  #allocation1 [shape = 'u32[144,128]{1,0:T(1,128)}', space=vmem, size = 0x12000, scoped, tag = 'internal scratch']
  %s0 = inlined_call_operand.vmem [shape: f32[16,1536], index: 0, kind: input, shape index: {}]
  %s1 = inlined_call_operand.hbm [shape: bf16[1536,256], index: 1, kind: input, shape index: {}]
  %s2 = inlined_call_operand.vmem [shape: f32[1,256], index: 2, kind: input, shape index: {}]
  %s3 = inlined_call_operand.vmem [shape: bf16[256,128], index: 3, kind: input, shape index: {}]
  %s4 = inlined_call_operand.vmem [shape: f32[1,128], index: 4, kind: input, shape index: {}]
  %s5 = inlined_call_operand.vmem [shape: f32[16,256], index: 5, kind: output, shape index: {0}]
  %s6 = inlined_call_operand.vmem [shape: f32[16,128], index: 6, kind: output, shape index: {1}]
  %7 = xla_tuple %s5, %s6
  %s8 = sld [smem:[#allocation0]]
  $region50: #{mlp1_forward.1} parent=0
    _
  %s10 = ssub.s32 1, %s8
  %s11 = scalar_select 0, %s10, %s8
  $region1: #{mlp1_forward.1} parent=0
    #allocation2 [shape = 'u8[786432]{0}', space=vmem, size = 0xc0000, scoped, tag = 'input window, operand 1, single buffered']
    #allocation3 [shape = 's32[1]{0}', space=sflag, size = 0x4, scoped, tag = 'scoped memory for mlp1_forward.1']
    %12 = vsyncpa [#allocation3], 0
    // Predicated region
    $region2: #{mlp1_forward.1} parent=1 // pred_check
      _
    $region3: #{mlp1_forward.1} parent=1 // pred_check_branch
      %14 = sbr.rel (0) target = $region5
    $region4: #{mlp1_forward.1} parent=1 // pred_region
      _
    $region5: #{mlp1_forward.1} parent=1 // pred_fallthru
      _
    // Predicated region
    $region6: #{mlp1_forward.1} parent=1 // pred_check
      _
    $region7: #{mlp1_forward.1} parent=1 // pred_check_branch
      %16 = sbr.rel (0) target = $region9
    $region8: #{mlp1_forward.1} parent=1 // pred_region
      %s18 = ssub.s32 24576, 24576
      %19 = vsyncadd [#allocation3], %s18
      %s20 = sshll.u32 [#allocation2], 4
      %s21 = int_to_ptr.vmem [resolvable:$true] %s20
      %26 = dma.hbm_to_vmem [thread:$0]  %s1, 24576, %s21, [#allocation3], 128, 128, 8
    $region9: #{mlp1_forward.1} parent=1 // pred_fallthru
      _
    // Predicated region
    $region10: #{mlp1_forward.1} parent=1 // pred_check
      _
    $region11: #{mlp1_forward.1} parent=1 // pred_check_branch
      %28 = sbr.rel (0) target = $region13
    $region12: #{mlp1_forward.1} parent=1 // pred_region
      _
    $region13: #{mlp1_forward.1} parent=1 // pred_fallthru
      _
    // Predicated region
    $region14: #{mlp1_forward.1} parent=1 // pred_check
      _
    $region15: #{mlp1_forward.1} parent=1 // pred_check_branch
      %30 = sbr.rel (0) target = $region17
    $region16: #{mlp1_forward.1} parent=1 // pred_region
      _
    $region17: #{mlp1_forward.1} parent=1 // pred_fallthru
      _
    // Predicated region
    $region18: #{mlp1_forward.1} parent=1 // pred_check
      _
    $region19: #{mlp1_forward.1} parent=1 // pred_check_branch
      %32 = sbr.rel (0) target = $region21
    $region20: #{mlp1_forward.1} parent=1 // pred_region
      _
    $region21: #{mlp1_forward.1} parent=1 // pred_fallthru
      _
    // Predicated region
    $region22: #{mlp1_forward.1} parent=1 // pred_check
      _
    $region23: #{mlp1_forward.1} parent=1 // pred_check_branch
      %34 = sbr.rel (0) target = $region25
    $region24: #{mlp1_forward.1} parent=1 // pred_region
      %35 = dma.done [#allocation3], 24576
    $region25: #{mlp1_forward.1} parent=1 // pred_fallthru
      _
    %p37 = scmp.eq.s32.totalorder 0, 0
    // Predicated region
    $region26: #{mlp1_forward.1} parent=1 // pred_check
      %p38 = pneg %p37
    $region27: #{mlp1_forward.1} parent=1 // pred_check_branch
      %40 = sbr.rel (%p38) target = $region29
    $region28: #{mlp1_forward.1} parent=1 // pred_region
      %41 = vst [vmem:[%s5] sm:$0xff] 0.0
      %42 = vst [vmem:[%s5 + $0x8] sm:$0xff] 0.0
      %43 = vst [vmem:[%s5 + $0x10] sm:$0xff] 0.0
      %44 = vst [vmem:[%s5 + $0x18] sm:$0xff] 0.0
    $region29: #{mlp1_forward.1} parent=1 // pred_fallthru
      _
    %v45 = vld [vmem:[%s5] sm:$0xff]
    %v46 = vld [vmem:[%s5 + $0x8] sm:$0xff]
    %v47 = vld [vmem:[%s5 + $0x10] sm:$0xff]
    %v48 = vld [vmem:[%s5 + $0x18] sm:$0xff]
    %v49 = vld [vmem:[%s0] sm:$0xff]
    %v50 = vld [vmem:[%s0 + $0x8] sm:$0xff]
    %v51 = vld [vmem:[%s0 + $0x10] sm:$0xff]
    %v52 = vld [vmem:[%s0 + $0x18] sm:$0xff]
    %v53 = vld [vmem:[%s0 + $0x20] sm:$0xff]
    %v54 = vld [vmem:[%s0 + $0x28] sm:$0xff]
    %v55 = vld [vmem:[%s0 + $0x30] sm:$0xff]
    %v56 = vld [vmem:[%s0 + $0x38] sm:$0xff]
    %v57 = vld [vmem:[%s0 + $0x40] sm:$0xff]
    %v58 = vld [vmem:[%s0 + $0x48] sm:$0xff]
    %v59 = vld [vmem:[%s0 + $0x50] sm:$0xff]
    %v60 = vld [vmem:[%s0 + $0x58] sm:$0xff]
    %v61 = vld [vmem:[%s0 + $0x60] sm:$0xff]
    %v62 = vld [vmem:[%s0 + $0x68] sm:$0xff]
    %v63 = vld [vmem:[%s0 + $0x70] sm:$0xff]
    %v64 = vld [vmem:[%s0 + $0x78] sm:$0xff]
    %v65 = vld [vmem:[%s0 + $0x80] sm:$0xff]
    %v66 = vld [vmem:[%s0 + $0x88] sm:$0xff]
    %v67 = vld [vmem:[%s0 + $0x90] sm:$0xff]
    %v68 = vld [vmem:[%s0 + $0x98] sm:$0xff]
    %v69 = vld [vmem:[%s0 + $0xa0] sm:$0xff]
    %v70 = vld [vmem:[%s0 + $0xa8] sm:$0xff]
    %v71 = vld [vmem:[%s0 + $0xb0] sm:$0xff]
    %v72 = vld [vmem:[%s0 + $0xb8] sm:$0xff]
    %v73 = vpack.c.bf16 %v61, %v49
    %v74 = vpack.c.bf16 %v62, %v50
    %v75 = vpack.c.bf16 %v63, %v51
    %v76 = vpack.c.bf16 %v64, %v52
    %v77 = vpack.c.bf16 %v65, %v53
    %v78 = vpack.c.bf16 %v66, %v54
    %v79 = vpack.c.bf16 %v67, %v55
    %v80 = vpack.c.bf16 %v68, %v56
    %v81 = vpack.c.bf16 %v69, %v57
    %v82 = vpack.c.bf16 %v70, %v58
    %v83 = vpack.c.bf16 %v71, %v59
    %v84 = vpack.c.bf16 %v72, %v60
    %v85 = vld [vmem:[#allocation2] sm:$0xff]
    %v86 = vld [vmem:[#allocation2 + $0x8] sm:$0xff]
    %v87 = vld [vmem:[#allocation2 + $0x10] sm:$0xff]
    %v88 = vld [vmem:[#allocation2 + $0x18] sm:$0xff]
    %v89 = vld [vmem:[#allocation2 + $0x20] sm:$0xff]
    %v90 = vld [vmem:[#allocation2 + $0x28] sm:$0xff]
    %v91 = vld [vmem:[#allocation2 + $0x30] sm:$0xff]
    %v92 = vld [vmem:[#allocation2 + $0x38] sm:$0xff]
    %v93 = vld [vmem:[#allocation2 + $0x40] sm:$0xff]
    %v94 = vld [vmem:[#allocation2 + $0x48] sm:$0xff]
    %v95 = vld [vmem:[#allocation2 + $0x50] sm:$0xff]
    %v96 = vld [vmem:[#allocation2 + $0x58] sm:$0xff]
    %v97 = vld [vmem:[#allocation2 + $0x60] sm:$0xff]
    %v98 = vld [vmem:[#allocation2 + $0x68] sm:$0xff]
    %v99 = vld [vmem:[#allocation2 + $0x70] sm:$0xff]
    %v100 = vld [vmem:[#allocation2 + $0x78] sm:$0xff]
    %v101 = vld [vmem:[#allocation2 + $0x80] sm:$0xff]
    %v102 = vld [vmem:[#allocation2 + $0x88] sm:$0xff]
    %v103 = vld [vmem:[#allocation2 + $0x90] sm:$0xff]
    %v104 = vld [vmem:[#allocation2 + $0x98] sm:$0xff]
    %v105 = vld [vmem:[#allocation2 + $0xa0] sm:$0xff]
    %v106 = vld [vmem:[#allocation2 + $0xa8] sm:$0xff]
    %v107 = vld [vmem:[#allocation2 + $0xb0] sm:$0xff]
    %v108 = vld [vmem:[#allocation2 + $0xb8] sm:$0xff]
    %v109 = vld [vmem:[#allocation2 + $0xc0] sm:$0xff]
    %v110 = vld [vmem:[#allocation2 + $0xc8] sm:$0xff]
    %v111 = vld [vmem:[#allocation2 + $0xd0] sm:$0xff]
    %v112 = vld [vmem:[#allocation2 + $0xd8] sm:$0xff]
    %v113 = vld [vmem:[#allocation2 + $0xe0] sm:$0xff]
    %v114 = vld [vmem:[#allocation2 + $0xe8] sm:$0xff]
    %v115 = vld [vmem:[#allocation2 + $0xf0] sm:$0xff]
    %v116 = vld [vmem:[#allocation2 + $0xf8] sm:$0xff]
    %v117 = vld [vmem:[#allocation2 + $0x100] sm:$0xff]
    %v118 = vld [vmem:[#allocation2 + $0x108] sm:$0xff]
    %v119 = vld [vmem:[#allocation2 + $0x110] sm:$0xff]
    %v120 = vld [vmem:[#allocation2 + $0x118] sm:$0xff]
    %v121 = vld [vmem:[#allocation2 + $0x120] sm:$0xff]
    %v122 = vld [vmem:[#allocation2 + $0x128] sm:$0xff]
    %v123 = vld [vmem:[#allocation2 + $0x130] sm:$0xff]
    %v124 = vld [vmem:[#allocation2 + $0x138] sm:$0xff]
    %v125 = vld [vmem:[#allocation2 + $0x140] sm:$0xff]
    %v126 = vld [vmem:[#allocation2 + $0x148] sm:$0xff]
    %v127 = vld [vmem:[#allocation2 + $0x150] sm:$0xff]
    %v128 = vld [vmem:[#allocation2 + $0x158] sm:$0xff]
    %v129 = vld [vmem:[#allocation2 + $0x160] sm:$0xff]
    %v130 = vld [vmem:[#allocation2 + $0x168] sm:$0xff]
    %v131 = vld [vmem:[#allocation2 + $0x170] sm:$0xff]
    %v132 = vld [vmem:[#allocation2 + $0x178] sm:$0xff]
    %v133 = vld [vmem:[#allocation2 + $0x180] sm:$0xff]
    %v134 = vld [vmem:[#allocation2 + $0x188] sm:$0xff]
    %v135 = vld [vmem:[#allocation2 + $0x190] sm:$0xff]
    %v136 = vld [vmem:[#allocation2 + $0x198] sm:$0xff]
    %v137 = vld [vmem:[#allocation2 + $0x1a0] sm:$0xff]
    %v138 = vld [vmem:[#allocation2 + $0x1a8] sm:$0xff]
    %v139 = vld [vmem:[#allocation2 + $0x1b0] sm:$0xff]
    %v140 = vld [vmem:[#allocation2 + $0x1b8] sm:$0xff]
    %v141 = vld [vmem:[#allocation2 + $0x1c0] sm:$0xff]
    %v142 = vld [vmem:[#allocation2 + $0x1c8] sm:$0xff]
    %v143 = vld [vmem:[#allocation2 + $0x1d0] sm:$0xff]
    %v144 = vld [vmem:[#allocation2 + $0x1d8] sm:$0xff]
    %v145 = vld [vmem:[#allocation2 + $0x1e0] sm:$0xff]
    %v146 = vld [vmem:[#allocation2 + $0x1e8] sm:$0xff]
    %v147 = vld [vmem:[#allocation2 + $0x1f0] sm:$0xff]
    %v148 = vld [vmem:[#allocation2 + $0x1f8] sm:$0xff]
    %v149 = vld [vmem:[#allocation2 + $0x200] sm:$0xff]
    %v150 = vld [vmem:[#allocation2 + $0x208] sm:$0xff]
    %v151 = vld [vmem:[#allocation2 + $0x210] sm:$0xff]
    %v152 = vld [vmem:[#allocation2 + $0x218] sm:$0xff]
    %v153 = vld [vmem:[#allocation2 + $0x220] sm:$0xff]
    %v154 = vld [vmem:[#allocation2 + $0x228] sm:$0xff]
    %v155 = vld [vmem:[#allocation2 + $0x230] sm:$0xff]
    %v156 = vld [vmem:[#allocation2 + $0x238] sm:$0xff]
    %v157 = vld [vmem:[#allocation2 + $0x240] sm:$0xff]
    %v158 = vld [vmem:[#allocation2 + $0x248] sm:$0xff]
    %v159 = vld [vmem:[#allocation2 + $0x250] sm:$0xff]
    %v160 = vld [vmem:[#allocation2 + $0x258] sm:$0xff]
    %v161 = vld [vmem:[#allocation2 + $0x260] sm:$0xff]
    %v162 = vld [vmem:[#allocation2 + $0x268] sm:$0xff]
    %v163 = vld [vmem:[#allocation2 + $0x270] sm:$0xff]
    %v164 = vld [vmem:[#allocation2 + $0x278] sm:$0xff]
    %v165 = vld [vmem:[#allocation2 + $0x280] sm:$0xff]
    %v166 = vld [vmem:[#allocation2 + $0x288] sm:$0xff]
    %v167 = vld [vmem:[#allocation2 + $0x290] sm:$0xff]
    %v168 = vld [vmem:[#allocation2 + $0x298] sm:$0xff]
    %v169 = vld [vmem:[#allocation2 + $0x2a0] sm:$0xff]
    %v170 = vld [vmem:[#allocation2 + $0x2a8] sm:$0xff]
    %v171 = vld [vmem:[#allocation2 + $0x2b0] sm:$0xff]
    %v172 = vld [vmem:[#allocation2 + $0x2b8] sm:$0xff]
    %v173 = vld [vmem:[#allocation2 + $0x2c0] sm:$0xff]
    %v174 = vld [vmem:[#allocation2 + $0x2c8] sm:$0xff]
    %v175 = vld [vmem:[#allocation2 + $0x2d0] sm:$0xff]
    %v176 = vld [vmem:[#allocation2 + $0x2d8] sm:$0xff]
    %v177 = vld [vmem:[#allocation2 + $0x2e0] sm:$0xff]
    %v178 = vld [vmem:[#allocation2 + $0x2e8] sm:$0xff]
    %v179 = vld [vmem:[#allocation2 + $0x2f0] sm:$0xff]
    %v180 = vld [vmem:[#allocation2 + $0x2f8] sm:$0xff]
    %v181 = vld [vmem:[#allocation2 + $0x300] sm:$0xff]
    %v182 = vld [vmem:[#allocation2 + $0x308] sm:$0xff]
    %v183 = vld [vmem:[#allocation2 + $0x310] sm:$0xff]
    %v184 = vld [vmem:[#allocation2 + $0x318] sm:$0xff]
    %v185 = vld [vmem:[#allocation2 + $0x320] sm:$0xff]
    %v186 = vld [vmem:[#allocation2 + $0x328] sm:$0xff]
    %v187 = vld [vmem:[#allocation2 + $0x330] sm:$0xff]
    %v188 = vld [vmem:[#allocation2 + $0x338] sm:$0xff]
    %v189 = vld [vmem:[#allocation2 + $0x340] sm:$0xff]
    %v190 = vld [vmem:[#allocation2 + $0x348] sm:$0xff]
    %v191 = vld [vmem:[#allocation2 + $0x350] sm:$0xff]
    %v192 = vld [vmem:[#allocation2 + $0x358] sm:$0xff]
    %v193 = vld [vmem:[#allocation2 + $0x360] sm:$0xff]
    %v194 = vld [vmem:[#allocation2 + $0x368] sm:$0xff]
    %v195 = vld [vmem:[#allocation2 + $0x370] sm:$0xff]
    %v196 = vld [vmem:[#allocation2 + $0x378] sm:$0xff]
    %v197 = vld [vmem:[#allocation2 + $0x380] sm:$0xff]
    %v198 = vld [vmem:[#allocation2 + $0x388] sm:$0xff]
    %v199 = vld [vmem:[#allocation2 + $0x390] sm:$0xff]
    %v200 = vld [vmem:[#allocation2 + $0x398] sm:$0xff]
    %v201 = vld [vmem:[#allocation2 + $0x3a0] sm:$0xff]
    %v202 = vld [vmem:[#allocation2 + $0x3a8] sm:$0xff]
    %v203 = vld [vmem:[#allocation2 + $0x3b0] sm:$0xff]
    %v204 = vld [vmem:[#allocation2 + $0x3b8] sm:$0xff]
    %v205 = vld [vmem:[#allocation2 + $0x3c0] sm:$0xff]
    %v206 = vld [vmem:[#allocation2 + $0x3c8] sm:$0xff]
    %v207 = vld [vmem:[#allocation2 + $0x3d0] sm:$0xff]
    %v208 = vld [vmem:[#allocation2 + $0x3d8] sm:$0xff]
    %v209 = vld [vmem:[#allocation2 + $0x3e0] sm:$0xff]
    %v210 = vld [vmem:[#allocation2 + $0x3e8] sm:$0xff]
    %v211 = vld [vmem:[#allocation2 + $0x3f0] sm:$0xff]
    %v212 = vld [vmem:[#allocation2 + $0x3f8] sm:$0xff]
    %v213 = vld [vmem:[#allocation2 + $0x400] sm:$0xff]
    %v214 = vld [vmem:[#allocation2 + $0x408] sm:$0xff]
    %v215 = vld [vmem:[#allocation2 + $0x410] sm:$0xff]
    %v216 = vld [vmem:[#allocation2 + $0x418] sm:$0xff]
    %v217 = vld [vmem:[#allocation2 + $0x420] sm:$0xff]
    %v218 = vld [vmem:[#allocation2 + $0x428] sm:$0xff]
    %v219 = vld [vmem:[#allocation2 + $0x430] sm:$0xff]
    %v220 = vld [vmem:[#allocation2 + $0x438] sm:$0xff]
    %v221 = vld [vmem:[#allocation2 + $0x440] sm:$0xff]
    %v222 = vld [vmem:[#allocation2 + $0x448] sm:$0xff]
    %v223 = vld [vmem:[#allocation2 + $0x450] sm:$0xff]
    %v224 = vld [vmem:[#allocation2 + $0x458] sm:$0xff]
    %v225 = vld [vmem:[#allocation2 + $0x460] sm:$0xff]
    %v226 = vld [vmem:[#allocation2 + $0x468] sm:$0xff]
    %v227 = vld [vmem:[#allocation2 + $0x470] sm:$0xff]
    %v228 = vld [vmem:[#allocation2 + $0x478] sm:$0xff]
    %v229 = vld [vmem:[#allocation2 + $0x480] sm:$0xff]
    %v230 = vld [vmem:[#allocation2 + $0x488] sm:$0xff]
    %v231 = vld [vmem:[#allocation2 + $0x490] sm:$0xff]
    %v232 = vld [vmem:[#allocation2 + $0x498] sm:$0xff]
    %v233 = vld [vmem:[#allocation2 + $0x4a0] sm:$0xff]
    %v234 = vld [vmem:[#allocation2 + $0x4a8] sm:$0xff]
    %v235 = vld [vmem:[#allocation2 + $0x4b0] sm:$0xff]
    %v236 = vld [vmem:[#allocation2 + $0x4b8] sm:$0xff]
    %v237 = vld [vmem:[#allocation2 + $0x4c0] sm:$0xff]
    %v238 = vld [vmem:[#allocation2 + $0x4c8] sm:$0xff]
    %v239 = vld [vmem:[#allocation2 + $0x4d0] sm:$0xff]
    %v240 = vld [vmem:[#allocation2 + $0x4d8] sm:$0xff]
    %v241 = vld [vmem:[#allocation2 + $0x4e0] sm:$0xff]
    %v242 = vld [vmem:[#allocation2 + $0x4e8] sm:$0xff]
    %v243 = vld [vmem:[#allocation2 + $0x4f0] sm:$0xff]
    %v244 = vld [vmem:[#allocation2 + $0x4f8] sm:$0xff]
    %v245 = vld [vmem:[#allocation2 + $0x500] sm:$0xff]
    %v246 = vld [vmem:[#allocation2 + $0x508] sm:$0xff]
    %v247 = vld [vmem:[#allocation2 + $0x510] sm:$0xff]
    %v248 = vld [vmem:[#allocation2 + $0x518] sm:$0xff]
    %v249 = vld [vmem:[#allocation2 + $0x520] sm:$0xff]
    %v250 = vld [vmem:[#allocation2 + $0x528] sm:$0xff]
    %v251 = vld [vmem:[#allocation2 + $0x530] sm:$0xff]
    %v252 = vld [vmem:[#allocation2 + $0x538] sm:$0xff]
    %v253 = vld [vmem:[#allocation2 + $0x540] sm:$0xff]
    %v254 = vld [vmem:[#allocation2 + $0x548] sm:$0xff]
    %v255 = vld [vmem:[#allocation2 + $0x550] sm:$0xff]
    %v256 = vld [vmem:[#allocation2 + $0x558] sm:$0xff]
    %v257 = vld [vmem:[#allocation2 + $0x560] sm:$0xff]
    %v258 = vld [vmem:[#allocation2 + $0x568] sm:$0xff]
    %v259 = vld [vmem:[#allocation2 + $0x570] sm:$0xff]
    %v260 = vld [vmem:[#allocation2 + $0x578] sm:$0xff]
    %v261 = vld [vmem:[#allocation2 + $0x580] sm:$0xff]
    %v262 = vld [vmem:[#allocation2 + $0x588] sm:$0xff]
    %v263 = vld [vmem:[#allocation2 + $0x590] sm:$0xff]
    %v264 = vld [vmem:[#allocation2 + $0x598] sm:$0xff]
    %v265 = vld [vmem:[#allocation2 + $0x5a0] sm:$0xff]
    %v266 = vld [vmem:[#allocation2 + $0x5a8] sm:$0xff]
    %v267 = vld [vmem:[#allocation2 + $0x5b0] sm:$0xff]
    %v268 = vld [vmem:[#allocation2 + $0x5b8] sm:$0xff]
    %v269 = vld [vmem:[#allocation2 + $0x5c0] sm:$0xff]
    %v270 = vld [vmem:[#allocation2 + $0x5c8] sm:$0xff]
    %v271 = vld [vmem:[#allocation2 + $0x5d0] sm:$0xff]
    %v272 = vld [vmem:[#allocation2 + $0x5d8] sm:$0xff]
    %v273 = vld [vmem:[#allocation2 + $0x5e0] sm:$0xff]
    %v274 = vld [vmem:[#allocation2 + $0x5e8] sm:$0xff]
    %v275 = vld [vmem:[#allocation2 + $0x5f0] sm:$0xff]
    %v276 = vld [vmem:[#allocation2 + $0x5f8] sm:$0xff]
    %v469 = vunpack.c.l.b16 %v85
    %v470 = vunpack.c.h.b16 %v85
    %v471 = vunpack.c.l.b16 %v86
    %v472 = vunpack.c.h.b16 %v86
    %v473 = vunpack.c.l.b16 %v87
    %v474 = vunpack.c.h.b16 %v87
    %v475 = vunpack.c.l.b16 %v88
    %v476 = vunpack.c.h.b16 %v88
    %v477 = vunpack.c.l.b16 %v89
    %v478 = vunpack.c.h.b16 %v89
    %v479 = vunpack.c.l.b16 %v90
    %v480 = vunpack.c.h.b16 %v90
    %v481 = vunpack.c.l.b16 %v91
    %v482 = vunpack.c.h.b16 %v91
    %v483 = vunpack.c.l.b16 %v92
    %v484 = vunpack.c.h.b16 %v92
    %v485 = vunpack.c.l.b16 %v93
    %v486 = vunpack.c.h.b16 %v93
    %v487 = vunpack.c.l.b16 %v94
    %v488 = vunpack.c.h.b16 %v94
    %v489 = vunpack.c.l.b16 %v95
    %v490 = vunpack.c.h.b16 %v95
    %v491 = vunpack.c.l.b16 %v96
    %v492 = vunpack.c.h.b16 %v96
    %v493 = vunpack.c.l.b16 %v97
    %v494 = vunpack.c.h.b16 %v97
    %v495 = vunpack.c.l.b16 %v98
    %v496 = vunpack.c.h.b16 %v98
    %v497 = vunpack.c.l.b16 %v99
    %v498 = vunpack.c.h.b16 %v99
    %v499 = vunpack.c.l.b16 %v100
    %v500 = vunpack.c.h.b16 %v100
    %v501 = vunpack.c.l.b16 %v101
    %v502 = vunpack.c.h.b16 %v101
    %v503 = vunpack.c.l.b16 %v102
    %v504 = vunpack.c.h.b16 %v102
    %v505 = vunpack.c.l.b16 %v103
    %v506 = vunpack.c.h.b16 %v103
    %v507 = vunpack.c.l.b16 %v104
    %v508 = vunpack.c.h.b16 %v104
    %v509 = vunpack.c.l.b16 %v105
    %v510 = vunpack.c.h.b16 %v105
    %v511 = vunpack.c.l.b16 %v106
    %v512 = vunpack.c.h.b16 %v106
    %v513 = vunpack.c.l.b16 %v107
    %v514 = vunpack.c.h.b16 %v107
    %v515 = vunpack.c.l.b16 %v108
    %v516 = vunpack.c.h.b16 %v108
    %v517 = vunpack.c.l.b16 %v109
    %v518 = vunpack.c.h.b16 %v109
    %v519 = vunpack.c.l.b16 %v110
    %v520 = vunpack.c.h.b16 %v110
    %v521 = vunpack.c.l.b16 %v111
    %v522 = vunpack.c.h.b16 %v111
    %v523 = vunpack.c.l.b16 %v112
    %v524 = vunpack.c.h.b16 %v112
    %v525 = vunpack.c.l.b16 %v113
    %v526 = vunpack.c.h.b16 %v113
    %v527 = vunpack.c.l.b16 %v114
    %v528 = vunpack.c.h.b16 %v114
    %v529 = vunpack.c.l.b16 %v115
    %v530 = vunpack.c.h.b16 %v115
    %v531 = vunpack.c.l.b16 %v116
    %v532 = vunpack.c.h.b16 %v116
    %v533 = vunpack.c.l.b16 %v117
    %v534 = vunpack.c.h.b16 %v117
    %v535 = vunpack.c.l.b16 %v118
    %v536 = vunpack.c.h.b16 %v118
    %v537 = vunpack.c.l.b16 %v119
    %v538 = vunpack.c.h.b16 %v119
    %v539 = vunpack.c.l.b16 %v120
    %v540 = vunpack.c.h.b16 %v120
    %v541 = vunpack.c.l.b16 %v121
    %v542 = vunpack.c.h.b16 %v121
    %v543 = vunpack.c.l.b16 %v122
    %v544 = vunpack.c.h.b16 %v122
    %v545 = vunpack.c.l.b16 %v123
    %v546 = vunpack.c.h.b16 %v123
    %v547 = vunpack.c.l.b16 %v124
    %v548 = vunpack.c.h.b16 %v124
    %v549 = vunpack.c.l.b16 %v125
    %v550 = vunpack.c.h.b16 %v125
    %v551 = vunpack.c.l.b16 %v126
    %v552 = vunpack.c.h.b16 %v126
    %v553 = vunpack.c.l.b16 %v127
    %v554 = vunpack.c.h.b16 %v127
    %v555 = vunpack.c.l.b16 %v128
    %v556 = vunpack.c.h.b16 %v128
    %v557 = vunpack.c.l.b16 %v129
    %v558 = vunpack.c.h.b16 %v129
    %v559 = vunpack.c.l.b16 %v130
    %v560 = vunpack.c.h.b16 %v130
    %v561 = vunpack.c.l.b16 %v131
    %v562 = vunpack.c.h.b16 %v131
    %v563 = vunpack.c.l.b16 %v132
    %v564 = vunpack.c.h.b16 %v132
    %v565 = vunpack.c.l.b16 %v133
    %v566 = vunpack.c.h.b16 %v133
    %v567 = vunpack.c.l.b16 %v134
    %v568 = vunpack.c.h.b16 %v134
    %v569 = vunpack.c.l.b16 %v135
    %v570 = vunpack.c.h.b16 %v135
    %v571 = vunpack.c.l.b16 %v136
    %v572 = vunpack.c.h.b16 %v136
    %v573 = vunpack.c.l.b16 %v137
    %v574 = vunpack.c.h.b16 %v137
    %v575 = vunpack.c.l.b16 %v138
    %v576 = vunpack.c.h.b16 %v138
    %v577 = vunpack.c.l.b16 %v139
    %v578 = vunpack.c.h.b16 %v139
    %v579 = vunpack.c.l.b16 %v140
    %v580 = vunpack.c.h.b16 %v140
    %v581 = vunpack.c.l.b16 %v141
    %v582 = vunpack.c.h.b16 %v141
    %v583 = vunpack.c.l.b16 %v142
    %v584 = vunpack.c.h.b16 %v142
    %v585 = vunpack.c.l.b16 %v143
    %v586 = vunpack.c.h.b16 %v143
    %v587 = vunpack.c.l.b16 %v144
    %v588 = vunpack.c.h.b16 %v144
    %v589 = vunpack.c.l.b16 %v145
    %v590 = vunpack.c.h.b16 %v145
    %v591 = vunpack.c.l.b16 %v146
    %v592 = vunpack.c.h.b16 %v146
    %v593 = vunpack.c.l.b16 %v147
    %v594 = vunpack.c.h.b16 %v147
    %v595 = vunpack.c.l.b16 %v148
    %v596 = vunpack.c.h.b16 %v148
    %v597 = vunpack.c.l.b16 %v149
    %v598 = vunpack.c.h.b16 %v149
    %v599 = vunpack.c.l.b16 %v150
    %v600 = vunpack.c.h.b16 %v150
    %v601 = vunpack.c.l.b16 %v151
    %v602 = vunpack.c.h.b16 %v151
    %v603 = vunpack.c.l.b16 %v152
    %v604 = vunpack.c.h.b16 %v152
    %v605 = vunpack.c.l.b16 %v153
    %v606 = vunpack.c.h.b16 %v153
    %v607 = vunpack.c.l.b16 %v154
    %v608 = vunpack.c.h.b16 %v154
    %v609 = vunpack.c.l.b16 %v155
    %v610 = vunpack.c.h.b16 %v155
    %v611 = vunpack.c.l.b16 %v156
    %v612 = vunpack.c.h.b16 %v156
    %v613 = vunpack.c.l.b16 %v157
    %v614 = vunpack.c.h.b16 %v157
    %v615 = vunpack.c.l.b16 %v158
    %v616 = vunpack.c.h.b16 %v158
    %v617 = vunpack.c.l.b16 %v159
    %v618 = vunpack.c.h.b16 %v159
    %v619 = vunpack.c.l.b16 %v160
    %v620 = vunpack.c.h.b16 %v160
    %v621 = vunpack.c.l.b16 %v161
    %v622 = vunpack.c.h.b16 %v161
    %v623 = vunpack.c.l.b16 %v162
    %v624 = vunpack.c.h.b16 %v162
    %v625 = vunpack.c.l.b16 %v163
    %v626 = vunpack.c.h.b16 %v163
    %v627 = vunpack.c.l.b16 %v164
    %v628 = vunpack.c.h.b16 %v164
    %v629 = vunpack.c.l.b16 %v165
    %v630 = vunpack.c.h.b16 %v165
    %v631 = vunpack.c.l.b16 %v166
    %v632 = vunpack.c.h.b16 %v166
    %v633 = vunpack.c.l.b16 %v167
    %v634 = vunpack.c.h.b16 %v167
    %v635 = vunpack.c.l.b16 %v168
    %v636 = vunpack.c.h.b16 %v168
    %v637 = vunpack.c.l.b16 %v169
    %v638 = vunpack.c.h.b16 %v169
    %v639 = vunpack.c.l.b16 %v170
    %v640 = vunpack.c.h.b16 %v170
    %v641 = vunpack.c.l.b16 %v171
    %v642 = vunpack.c.h.b16 %v171
    %v643 = vunpack.c.l.b16 %v172
    %v644 = vunpack.c.h.b16 %v172
    %v645 = vunpack.c.l.b16 %v173
    %v646 = vunpack.c.h.b16 %v173
    %v647 = vunpack.c.l.b16 %v174
    %v648 = vunpack.c.h.b16 %v174
    %v649 = vunpack.c.l.b16 %v175
    %v650 = vunpack.c.h.b16 %v175
    %v651 = vunpack.c.l.b16 %v176
    %v652 = vunpack.c.h.b16 %v176
    %v653 = vunpack.c.l.b16 %v177
    %v654 = vunpack.c.h.b16 %v177
    %v655 = vunpack.c.l.b16 %v178
    %v656 = vunpack.c.h.b16 %v178
    %v657 = vunpack.c.l.b16 %v179
    %v658 = vunpack.c.h.b16 %v179
    %v659 = vunpack.c.l.b16 %v180
    %v660 = vunpack.c.h.b16 %v180
    %v661 = vunpack.c.l.b16 %v181
    %v662 = vunpack.c.h.b16 %v181
    %v663 = vunpack.c.l.b16 %v182
    %v664 = vunpack.c.h.b16 %v182
    %v665 = vunpack.c.l.b16 %v183
    %v666 = vunpack.c.h.b16 %v183
    %v667 = vunpack.c.l.b16 %v184
    %v668 = vunpack.c.h.b16 %v184
    %v669 = vunpack.c.l.b16 %v185
    %v670 = vunpack.c.h.b16 %v185
    %v671 = vunpack.c.l.b16 %v186
    %v672 = vunpack.c.h.b16 %v186
    %v673 = vunpack.c.l.b16 %v187
    %v674 = vunpack.c.h.b16 %v187
    %v675 = vunpack.c.l.b16 %v188
    %v676 = vunpack.c.h.b16 %v188
    %v677 = vunpack.c.l.b16 %v189
    %v678 = vunpack.c.h.b16 %v189
    %v679 = vunpack.c.l.b16 %v190
    %v680 = vunpack.c.h.b16 %v190
    %v681 = vunpack.c.l.b16 %v191
    %v682 = vunpack.c.h.b16 %v191
    %v683 = vunpack.c.l.b16 %v192
    %v684 = vunpack.c.h.b16 %v192
    %v685 = vunpack.c.l.b16 %v193
    %v686 = vunpack.c.h.b16 %v193
    %v687 = vunpack.c.l.b16 %v194
    %v688 = vunpack.c.h.b16 %v194
    %v689 = vunpack.c.l.b16 %v195
    %v690 = vunpack.c.h.b16 %v195
    %v691 = vunpack.c.l.b16 %v196
    %v692 = vunpack.c.h.b16 %v196
    %v693 = vunpack.c.l.b16 %v197
    %v694 = vunpack.c.h.b16 %v197
    %v695 = vunpack.c.l.b16 %v198
    %v696 = vunpack.c.h.b16 %v198
    %v697 = vunpack.c.l.b16 %v199
    %v698 = vunpack.c.h.b16 %v199
    %v699 = vunpack.c.l.b16 %v200
    %v700 = vunpack.c.h.b16 %v200
    %v701 = vunpack.c.l.b16 %v201
    %v702 = vunpack.c.h.b16 %v201
    %v703 = vunpack.c.l.b16 %v202
    %v704 = vunpack.c.h.b16 %v202
    %v705 = vunpack.c.l.b16 %v203
    %v706 = vunpack.c.h.b16 %v203
    %v707 = vunpack.c.l.b16 %v204
    %v708 = vunpack.c.h.b16 %v204
    %v709 = vunpack.c.l.b16 %v205
    %v710 = vunpack.c.h.b16 %v205
    %v711 = vunpack.c.l.b16 %v206
    %v712 = vunpack.c.h.b16 %v206
    %v713 = vunpack.c.l.b16 %v207
    %v714 = vunpack.c.h.b16 %v207
    %v715 = vunpack.c.l.b16 %v208
    %v716 = vunpack.c.h.b16 %v208
    %v717 = vunpack.c.l.b16 %v209
    %v718 = vunpack.c.h.b16 %v209
    %v719 = vunpack.c.l.b16 %v210
    %v720 = vunpack.c.h.b16 %v210
    %v721 = vunpack.c.l.b16 %v211
    %v722 = vunpack.c.h.b16 %v211
    %v723 = vunpack.c.l.b16 %v212
    %v724 = vunpack.c.h.b16 %v212
    %v725 = vunpack.c.l.b16 %v213
    %v726 = vunpack.c.h.b16 %v213
    %v727 = vunpack.c.l.b16 %v214
    %v728 = vunpack.c.h.b16 %v214
    %v729 = vunpack.c.l.b16 %v215
    %v730 = vunpack.c.h.b16 %v215
    %v731 = vunpack.c.l.b16 %v216
    %v732 = vunpack.c.h.b16 %v216
    %v733 = vunpack.c.l.b16 %v217
    %v734 = vunpack.c.h.b16 %v217
    %v735 = vunpack.c.l.b16 %v218
    %v736 = vunpack.c.h.b16 %v218
    %v737 = vunpack.c.l.b16 %v219
    %v738 = vunpack.c.h.b16 %v219
    %v739 = vunpack.c.l.b16 %v220
    %v740 = vunpack.c.h.b16 %v220
    %v741 = vunpack.c.l.b16 %v221
    %v742 = vunpack.c.h.b16 %v221
    %v743 = vunpack.c.l.b16 %v222
    %v744 = vunpack.c.h.b16 %v222
    %v745 = vunpack.c.l.b16 %v223
    %v746 = vunpack.c.h.b16 %v223
    %v747 = vunpack.c.l.b16 %v224
    %v748 = vunpack.c.h.b16 %v224
    %v749 = vunpack.c.l.b16 %v225
    %v750 = vunpack.c.h.b16 %v225
    %v751 = vunpack.c.l.b16 %v226
    %v752 = vunpack.c.h.b16 %v226
    %v753 = vunpack.c.l.b16 %v227
    %v754 = vunpack.c.h.b16 %v227
    %v755 = vunpack.c.l.b16 %v228
    %v756 = vunpack.c.h.b16 %v228
    %v757 = vunpack.c.l.b16 %v229
    %v758 = vunpack.c.h.b16 %v229
    %v759 = vunpack.c.l.b16 %v230
    %v760 = vunpack.c.h.b16 %v230
    %v761 = vunpack.c.l.b16 %v231
    %v762 = vunpack.c.h.b16 %v231
    %v763 = vunpack.c.l.b16 %v232
    %v764 = vunpack.c.h.b16 %v232
    %v765 = vunpack.c.l.b16 %v233
    %v766 = vunpack.c.h.b16 %v233
    %v767 = vunpack.c.l.b16 %v234
    %v768 = vunpack.c.h.b16 %v234
    %v769 = vunpack.c.l.b16 %v235
    %v770 = vunpack.c.h.b16 %v235
    %v771 = vunpack.c.l.b16 %v236
    %v772 = vunpack.c.h.b16 %v236
    %v773 = vunpack.c.l.b16 %v237
    %v774 = vunpack.c.h.b16 %v237
    %v775 = vunpack.c.l.b16 %v238
    %v776 = vunpack.c.h.b16 %v238
    %v777 = vunpack.c.l.b16 %v239
    %v778 = vunpack.c.h.b16 %v239
    %v779 = vunpack.c.l.b16 %v240
    %v780 = vunpack.c.h.b16 %v240
    %v781 = vunpack.c.l.b16 %v241
    %v782 = vunpack.c.h.b16 %v241
    %v783 = vunpack.c.l.b16 %v242
    %v784 = vunpack.c.h.b16 %v242
    %v785 = vunpack.c.l.b16 %v243
    %v786 = vunpack.c.h.b16 %v243
    %v787 = vunpack.c.l.b16 %v244
    %v788 = vunpack.c.h.b16 %v244
    %v789 = vunpack.c.l.b16 %v245
    %v790 = vunpack.c.h.b16 %v245
    %v791 = vunpack.c.l.b16 %v246
    %v792 = vunpack.c.h.b16 %v246
    %v793 = vunpack.c.l.b16 %v247
    %v794 = vunpack.c.h.b16 %v247
    %v795 = vunpack.c.l.b16 %v248
    %v796 = vunpack.c.h.b16 %v248
    %v797 = vunpack.c.l.b16 %v249
    %v798 = vunpack.c.h.b16 %v249
    %v799 = vunpack.c.l.b16 %v250
    %v800 = vunpack.c.h.b16 %v250
    %v801 = vunpack.c.l.b16 %v251
    %v802 = vunpack.c.h.b16 %v251
    %v803 = vunpack.c.l.b16 %v252
    %v804 = vunpack.c.h.b16 %v252
    %v805 = vunpack.c.l.b16 %v253
    %v806 = vunpack.c.h.b16 %v253
    %v807 = vunpack.c.l.b16 %v254
    %v808 = vunpack.c.h.b16 %v254
    %v809 = vunpack.c.l.b16 %v255
    %v810 = vunpack.c.h.b16 %v255
    %v811 = vunpack.c.l.b16 %v256
    %v812 = vunpack.c.h.b16 %v256
    %v813 = vunpack.c.l.b16 %v257
    %v814 = vunpack.c.h.b16 %v257
    %v815 = vunpack.c.l.b16 %v258
    %v816 = vunpack.c.h.b16 %v258
    %v817 = vunpack.c.l.b16 %v259
    %v818 = vunpack.c.h.b16 %v259
    %v819 = vunpack.c.l.b16 %v260
    %v820 = vunpack.c.h.b16 %v260
    %v821 = vunpack.c.l.b16 %v261
    %v822 = vunpack.c.h.b16 %v261
    %v823 = vunpack.c.l.b16 %v262
    %v824 = vunpack.c.h.b16 %v262
    %v825 = vunpack.c.l.b16 %v263
    %v826 = vunpack.c.h.b16 %v263
    %v827 = vunpack.c.l.b16 %v264
    %v828 = vunpack.c.h.b16 %v264
    %v829 = vunpack.c.l.b16 %v265
    %v830 = vunpack.c.h.b16 %v265
    %v831 = vunpack.c.l.b16 %v266
    %v832 = vunpack.c.h.b16 %v266
    %v833 = vunpack.c.l.b16 %v267
    %v834 = vunpack.c.h.b16 %v267
    %v835 = vunpack.c.l.b16 %v268
    %v836 = vunpack.c.h.b16 %v268
    %v837 = vunpack.c.l.b16 %v269
    %v838 = vunpack.c.h.b16 %v269
    %v839 = vunpack.c.l.b16 %v270
    %v840 = vunpack.c.h.b16 %v270
    %v841 = vunpack.c.l.b16 %v271
    %v842 = vunpack.c.h.b16 %v271
    %v843 = vunpack.c.l.b16 %v272
    %v844 = vunpack.c.h.b16 %v272
    %v845 = vunpack.c.l.b16 %v273
    %v846 = vunpack.c.h.b16 %v273
    %v847 = vunpack.c.l.b16 %v274
    %v848 = vunpack.c.h.b16 %v274
    %v849 = vunpack.c.l.b16 %v275
    %v850 = vunpack.c.h.b16 %v275
    %v851 = vunpack.c.l.b16 %v276
    %v852 = vunpack.c.h.b16 %v276
    %v853 = vpack.c.b16 %v471, %v469
    %v854 = vpack.c.b16 %v472, %v470
    %v855 = vpack.c.b16 %v475, %v473
    %v856 = vpack.c.b16 %v476, %v474
    %v857 = vpack.c.b16 %v479, %v477
    %v858 = vpack.c.b16 %v480, %v478
    %v859 = vpack.c.b16 %v483, %v481
    %v860 = vpack.c.b16 %v484, %v482
    %v861 = vpack.c.b16 %v487, %v485
    %v862 = vpack.c.b16 %v488, %v486
    %v863 = vpack.c.b16 %v491, %v489
    %v864 = vpack.c.b16 %v492, %v490
    %v865 = vpack.c.b16 %v495, %v493
    %v866 = vpack.c.b16 %v496, %v494
    %v867 = vpack.c.b16 %v499, %v497
    %v868 = vpack.c.b16 %v500, %v498
    %v869 = vpack.c.b16 %v503, %v501
    %v870 = vpack.c.b16 %v504, %v502
    %v871 = vpack.c.b16 %v507, %v505
    %v872 = vpack.c.b16 %v508, %v506
    %v873 = vpack.c.b16 %v511, %v509
    %v874 = vpack.c.b16 %v512, %v510
    %v875 = vpack.c.b16 %v515, %v513
    %v876 = vpack.c.b16 %v516, %v514
    %v877 = vpack.c.b16 %v519, %v517
    %v878 = vpack.c.b16 %v520, %v518
    %v879 = vpack.c.b16 %v523, %v521
    %v880 = vpack.c.b16 %v524, %v522
    %v881 = vpack.c.b16 %v527, %v525
    %v882 = vpack.c.b16 %v528, %v526
    %v883 = vpack.c.b16 %v531, %v529
    %v884 = vpack.c.b16 %v532, %v530
    %v885 = vpack.c.b16 %v535, %v533
    %v886 = vpack.c.b16 %v536, %v534
    %v887 = vpack.c.b16 %v539, %v537
    %v888 = vpack.c.b16 %v540, %v538
    %v889 = vpack.c.b16 %v543, %v541
    %v890 = vpack.c.b16 %v544, %v542
    %v891 = vpack.c.b16 %v547, %v545
    %v892 = vpack.c.b16 %v548, %v546
    %v893 = vpack.c.b16 %v551, %v549
    %v894 = vpack.c.b16 %v552, %v550
    %v895 = vpack.c.b16 %v555, %v553
    %v896 = vpack.c.b16 %v556, %v554
    %v897 = vpack.c.b16 %v559, %v557
    %v898 = vpack.c.b16 %v560, %v558
    %v899 = vpack.c.b16 %v563, %v561
    %v900 = vpack.c.b16 %v564, %v562
    %v901 = vpack.c.b16 %v567, %v565
    %v902 = vpack.c.b16 %v568, %v566
    %v903 = vpack.c.b16 %v571, %v569
    %v904 = vpack.c.b16 %v572, %v570
    %v905 = vpack.c.b16 %v575, %v573
    %v906 = vpack.c.b16 %v576, %v574
    %v907 = vpack.c.b16 %v579, %v577
    %v908 = vpack.c.b16 %v580, %v578
    %v909 = vpack.c.b16 %v583, %v581
    %v910 = vpack.c.b16 %v584, %v582
    %v911 = vpack.c.b16 %v587, %v585
    %v912 = vpack.c.b16 %v588, %v586
    %v913 = vpack.c.b16 %v591, %v589
    %v914 = vpack.c.b16 %v592, %v590
    %v915 = vpack.c.b16 %v595, %v593
    %v916 = vpack.c.b16 %v596, %v594
    %v917 = vpack.c.b16 %v599, %v597
    %v918 = vpack.c.b16 %v600, %v598
    %v919 = vpack.c.b16 %v603, %v601
    %v920 = vpack.c.b16 %v604, %v602
    %v921 = vpack.c.b16 %v607, %v605
    %v922 = vpack.c.b16 %v608, %v606
    %v923 = vpack.c.b16 %v611, %v609
    %v924 = vpack.c.b16 %v612, %v610
    %v925 = vpack.c.b16 %v615, %v613
    %v926 = vpack.c.b16 %v616, %v614
    %v927 = vpack.c.b16 %v619, %v617
    %v928 = vpack.c.b16 %v620, %v618
    %v929 = vpack.c.b16 %v623, %v621
    %v930 = vpack.c.b16 %v624, %v622
    %v931 = vpack.c.b16 %v627, %v625
    %v932 = vpack.c.b16 %v628, %v626
    %v933 = vpack.c.b16 %v631, %v629
    %v934 = vpack.c.b16 %v632, %v630
    %v935 = vpack.c.b16 %v635, %v633
    %v936 = vpack.c.b16 %v636, %v634
    %v937 = vpack.c.b16 %v639, %v637
    %v938 = vpack.c.b16 %v640, %v638
    %v939 = vpack.c.b16 %v643, %v641
    %v940 = vpack.c.b16 %v644, %v642
    %v941 = vpack.c.b16 %v647, %v645
    %v942 = vpack.c.b16 %v648, %v646
    %v943 = vpack.c.b16 %v651, %v649
    %v944 = vpack.c.b16 %v652, %v650
    %v945 = vpack.c.b16 %v655, %v653
    %v946 = vpack.c.b16 %v656, %v654
    %v947 = vpack.c.b16 %v659, %v657
    %v948 = vpack.c.b16 %v660, %v658
    %v949 = vpack.c.b16 %v663, %v661
    %v950 = vpack.c.b16 %v664, %v662
    %v951 = vpack.c.b16 %v667, %v665
    %v952 = vpack.c.b16 %v668, %v666
    %v953 = vpack.c.b16 %v671, %v669
    %v954 = vpack.c.b16 %v672, %v670
    %v955 = vpack.c.b16 %v675, %v673
    %v956 = vpack.c.b16 %v676, %v674
    %v957 = vpack.c.b16 %v679, %v677
    %v958 = vpack.c.b16 %v680, %v678
    %v959 = vpack.c.b16 %v683, %v681
    %v960 = vpack.c.b16 %v684, %v682
    %v961 = vpack.c.b16 %v687, %v685
    %v962 = vpack.c.b16 %v688, %v686
    %v963 = vpack.c.b16 %v691, %v689
    %v964 = vpack.c.b16 %v692, %v690
    %v965 = vpack.c.b16 %v695, %v693
    %v966 = vpack.c.b16 %v696, %v694
    %v967 = vpack.c.b16 %v699, %v697
    %v968 = vpack.c.b16 %v700, %v698
    %v969 = vpack.c.b16 %v703, %v701
    %v970 = vpack.c.b16 %v704, %v702
    %v971 = vpack.c.b16 %v707, %v705
    %v972 = vpack.c.b16 %v708, %v706
    %v973 = vpack.c.b16 %v711, %v709
    %v974 = vpack.c.b16 %v712, %v710
    %v975 = vpack.c.b16 %v715, %v713
    %v976 = vpack.c.b16 %v716, %v714
    %v977 = vpack.c.b16 %v719, %v717
    %v978 = vpack.c.b16 %v720, %v718
    %v979 = vpack.c.b16 %v723, %v721
    %v980 = vpack.c.b16 %v724, %v722
    %v981 = vpack.c.b16 %v727, %v725
    %v982 = vpack.c.b16 %v728, %v726
    %v983 = vpack.c.b16 %v731, %v729
    %v984 = vpack.c.b16 %v732, %v730
    %v985 = vpack.c.b16 %v735, %v733
    %v986 = vpack.c.b16 %v736, %v734
    %v987 = vpack.c.b16 %v739, %v737
    %v988 = vpack.c.b16 %v740, %v738
    %v989 = vpack.c.b16 %v743, %v741
    %v990 = vpack.c.b16 %v744, %v742
    %v991 = vpack.c.b16 %v747, %v745
    %v992 = vpack.c.b16 %v748, %v746
    %v993 = vpack.c.b16 %v751, %v749
    %v994 = vpack.c.b16 %v752, %v750
    %v995 = vpack.c.b16 %v755, %v753
    %v996 = vpack.c.b16 %v756, %v754
    %v997 = vpack.c.b16 %v759, %v757
    %v998 = vpack.c.b16 %v760, %v758
    %v999 = vpack.c.b16 %v763, %v761
    %v1000 = vpack.c.b16 %v764, %v762
    %v1001 = vpack.c.b16 %v767, %v765
    %v1002 = vpack.c.b16 %v768, %v766
    %v1003 = vpack.c.b16 %v771, %v769
    %v1004 = vpack.c.b16 %v772, %v770
    %v1005 = vpack.c.b16 %v775, %v773
    %v1006 = vpack.c.b16 %v776, %v774
    %v1007 = vpack.c.b16 %v779, %v777
    %v1008 = vpack.c.b16 %v780, %v778
    %v1009 = vpack.c.b16 %v783, %v781
    %v1010 = vpack.c.b16 %v784, %v782
    %v1011 = vpack.c.b16 %v787, %v785
    %v1012 = vpack.c.b16 %v788, %v786
    %v1013 = vpack.c.b16 %v791, %v789
    %v1014 = vpack.c.b16 %v792, %v790
    %v1015 = vpack.c.b16 %v795, %v793
    %v1016 = vpack.c.b16 %v796, %v794
    %v1017 = vpack.c.b16 %v799, %v797
    %v1018 = vpack.c.b16 %v800, %v798
    %v1019 = vpack.c.b16 %v803, %v801
    %v1020 = vpack.c.b16 %v804, %v802
    %v1021 = vpack.c.b16 %v807, %v805
    %v1022 = vpack.c.b16 %v808, %v806
    %v1023 = vpack.c.b16 %v811, %v809
    %v1024 = vpack.c.b16 %v812, %v810
    %v1025 = vpack.c.b16 %v815, %v813
    %v1026 = vpack.c.b16 %v816, %v814
    %v1027 = vpack.c.b16 %v819, %v817
    %v1028 = vpack.c.b16 %v820, %v818
    %v1029 = vpack.c.b16 %v823, %v821
    %v1030 = vpack.c.b16 %v824, %v822
    %v1031 = vpack.c.b16 %v827, %v825
    %v1032 = vpack.c.b16 %v828, %v826
    %v1033 = vpack.c.b16 %v831, %v829
    %v1034 = vpack.c.b16 %v832, %v830
    %v1035 = vpack.c.b16 %v835, %v833
    %v1036 = vpack.c.b16 %v836, %v834
    %v1037 = vpack.c.b16 %v839, %v837
    %v1038 = vpack.c.b16 %v840, %v838
    %v1039 = vpack.c.b16 %v843, %v841
    %v1040 = vpack.c.b16 %v844, %v842
    %v1041 = vpack.c.b16 %v847, %v845
    %v1042 = vpack.c.b16 %v848, %v846
    %v1043 = vpack.c.b16 %v851, %v849
    %v1044 = vpack.c.b16 %v852, %v850
    %1237 = vmatprep.subr.bf16.mxu0 %v868
    %1238 = vmatpush1.bf16.msra.mxu0 %v867
    %1239 = vmatprep.subr.bf16.mxu0 %v866
    %1240 = vmatpush1.bf16.msra.mxu0 %v865
    %1241 = vmatprep.subr.bf16.mxu0 %v864
    %1242 = vmatpush1.bf16.msra.mxu0 %v863
    %1243 = vmatprep.subr.bf16.mxu0 %v862
    %1244 = vmatpush1.bf16.msra.mxu0 %v861
    %1245 = vmatprep.subr.bf16.mxu0 %v860
    %1246 = vmatpush1.bf16.msra.mxu0 %v859
    %1247 = vmatprep.subr.bf16.mxu0 %v858
    %1248 = vmatpush1.bf16.msra.mxu0 %v857
    %1249 = vmatprep.subr.bf16.mxu0 %v856
    %1250 = vmatpush1.bf16.msra.mxu0 %v855
    %1251 = vmatprep.subr.bf16.mxu0 %v854
    %1252 = vmatpush1.bf16.msra.mxu0 %v853
    %1253 = vmatprep.subr.bf16.mxu0 %v884
    %1254 = vmatpush2.bf16.msra.mxu0 %v883
    %1255 = vmatprep.subr.bf16.mxu0 %v882
    %1256 = vmatpush2.bf16.msra.mxu0 %v881
    %1257 = vmatprep.subr.bf16.mxu0 %v880
    %1258 = vmatpush2.bf16.msra.mxu0 %v879
    %1259 = vmatprep.subr.bf16.mxu0 %v878
    %1260 = vmatpush2.bf16.msra.mxu0 %v877
    %1261 = vmatprep.subr.bf16.mxu0 %v876
    %1262 = vmatpush2.bf16.msra.mxu0 %v875
    %1263 = vmatprep.subr.bf16.mxu0 %v874
    %1264 = vmatpush2.bf16.msra.mxu0 %v873
    %1265 = vmatprep.subr.bf16.mxu0 %v872
    %1266 = vmatpush2.bf16.msra.mxu0 %v871
    %1267 = vmatprep.subr.bf16.mxu0 %v870
    %1268 = vmatpush2.bf16.msra.mxu0 %v869
    %1269 = vmatprep.mubr.bf16.mxu0 %v74
    %1270 = vmatmul.mubr.bf16.gmra.mxu0 %v73
    %v1271 = vpop.f32.mrf.mxu0
    %v1272 = vadd.f32 0.0, %v1271
    %v1273 = vpop.f32.mrf.mxu0
    %v1274 = vadd.f32 0.0, %v1273
    %v1275 = vpop.f32.mrf.mxu0
    %v1276 = vadd.f32 0.0, %v1275
    %v1277 = vpop.f32.mrf.mxu0
    %v1278 = vadd.f32 0.0, %v1277
    %1279 = vdwg.mxu0
    %1280 = vmatprep.subr.bf16.mxu0 %v900
    %1281 = vmatpush1.bf16.msra.mxu0 %v899
    %1282 = vmatprep.subr.bf16.mxu0 %v898
    %1283 = vmatpush1.bf16.msra.mxu0 %v897
    %1284 = vmatprep.subr.bf16.mxu0 %v896
    %1285 = vmatpush1.bf16.msra.mxu0 %v895
    %1286 = vmatprep.subr.bf16.mxu0 %v894
    %1287 = vmatpush1.bf16.msra.mxu0 %v893
    %1288 = vmatprep.subr.bf16.mxu0 %v892
    %1289 = vmatpush1.bf16.msra.mxu0 %v891
    %1290 = vmatprep.subr.bf16.mxu0 %v890
    %1291 = vmatpush1.bf16.msra.mxu0 %v889
    %1292 = vmatprep.subr.bf16.mxu0 %v888
    %1293 = vmatpush1.bf16.msra.mxu0 %v887
    %1294 = vmatprep.subr.bf16.mxu0 %v886
    %1295 = vmatpush1.bf16.msra.mxu0 %v885
    %1296 = vmatprep.subr.bf16.mxu0 %v916
    %1297 = vmatpush2.bf16.msra.mxu0 %v915
    %1298 = vmatprep.subr.bf16.mxu0 %v914
    %1299 = vmatpush2.bf16.msra.mxu0 %v913
    %1300 = vmatprep.subr.bf16.mxu0 %v912
    %1301 = vmatpush2.bf16.msra.mxu0 %v911
    %1302 = vmatprep.subr.bf16.mxu0 %v910
    %1303 = vmatpush2.bf16.msra.mxu0 %v909
    %1304 = vmatprep.subr.bf16.mxu0 %v908
    %1305 = vmatpush2.bf16.msra.mxu0 %v907
    %1306 = vmatprep.subr.bf16.mxu0 %v906
    %1307 = vmatpush2.bf16.msra.mxu0 %v905
    %1308 = vmatprep.subr.bf16.mxu0 %v904
    %1309 = vmatpush2.bf16.msra.mxu0 %v903
    %1310 = vmatprep.subr.bf16.mxu0 %v902
    %1311 = vmatpush2.bf16.msra.mxu0 %v901
    %1312 = vmatprep.mubr.bf16.mxu0 %v76
    %1313 = vmatmul.mubr.bf16.gmra.mxu0 %v75
    %v1314 = vpop.f32.mrf.mxu0
    %v1315 = vadd.f32 %v1272, %v1314
    %v1316 = vpop.f32.mrf.mxu0
    %v1317 = vadd.f32 %v1274, %v1316
    %v1318 = vpop.f32.mrf.mxu0
    %v1319 = vadd.f32 %v1276, %v1318
    %v1320 = vpop.f32.mrf.mxu0
    %v1321 = vadd.f32 %v1278, %v1320
    %1322 = vdwg.mxu0
    %1323 = vmatprep.subr.bf16.mxu0 %v932
    %1324 = vmatpush1.bf16.msra.mxu0 %v931
    %1325 = vmatprep.subr.bf16.mxu0 %v930
    %1326 = vmatpush1.bf16.msra.mxu0 %v929
    %1327 = vmatprep.subr.bf16.mxu0 %v928
    %1328 = vmatpush1.bf16.msra.mxu0 %v927
    %1329 = vmatprep.subr.bf16.mxu0 %v926
    %1330 = vmatpush1.bf16.msra.mxu0 %v925
    %1331 = vmatprep.subr.bf16.mxu0 %v924
    %1332 = vmatpush1.bf16.msra.mxu0 %v923
    %1333 = vmatprep.subr.bf16.mxu0 %v922
    %1334 = vmatpush1.bf16.msra.mxu0 %v921
    %1335 = vmatprep.subr.bf16.mxu0 %v920
    %1336 = vmatpush1.bf16.msra.mxu0 %v919
    %1337 = vmatprep.subr.bf16.mxu0 %v918
    %1338 = vmatpush1.bf16.msra.mxu0 %v917
    %1339 = vmatprep.subr.bf16.mxu0 %v948
    %1340 = vmatpush2.bf16.msra.mxu0 %v947
    %1341 = vmatprep.subr.bf16.mxu0 %v946
    %1342 = vmatpush2.bf16.msra.mxu0 %v945
    %1343 = vmatprep.subr.bf16.mxu0 %v944
    %1344 = vmatpush2.bf16.msra.mxu0 %v943
    %1345 = vmatprep.subr.bf16.mxu0 %v942
    %1346 = vmatpush2.bf16.msra.mxu0 %v941
    %1347 = vmatprep.subr.bf16.mxu0 %v940
    %1348 = vmatpush2.bf16.msra.mxu0 %v939
    %1349 = vmatprep.subr.bf16.mxu0 %v938
    %1350 = vmatpush2.bf16.msra.mxu0 %v937
    %1351 = vmatprep.subr.bf16.mxu0 %v936
    %1352 = vmatpush2.bf16.msra.mxu0 %v935
    %1353 = vmatprep.subr.bf16.mxu0 %v934
    %1354 = vmatpush2.bf16.msra.mxu0 %v933
    %1355 = vmatprep.mubr.bf16.mxu0 %v78
    %1356 = vmatmul.mubr.bf16.gmra.mxu0 %v77
    %v1357 = vpop.f32.mrf.mxu0
    %v1358 = vadd.f32 %v1315, %v1357
    %v1359 = vpop.f32.mrf.mxu0
    %v1360 = vadd.f32 %v1317, %v1359
    %v1361 = vpop.f32.mrf.mxu0
    %v1362 = vadd.f32 %v1319, %v1361
    %v1363 = vpop.f32.mrf.mxu0
    %v1364 = vadd.f32 %v1321, %v1363
    %1365 = vdwg.mxu0
    %1366 = vmatprep.subr.bf16.mxu0 %v964
    %1367 = vmatpush1.bf16.msra.mxu0 %v963
    %1368 = vmatprep.subr.bf16.mxu0 %v962
    %1369 = vmatpush1.bf16.msra.mxu0 %v961
    %1370 = vmatprep.subr.bf16.mxu0 %v960
    %1371 = vmatpush1.bf16.msra.mxu0 %v959
    %1372 = vmatprep.subr.bf16.mxu0 %v958
    %1373 = vmatpush1.bf16.msra.mxu0 %v957
    %1374 = vmatprep.subr.bf16.mxu0 %v956
    %1375 = vmatpush1.bf16.msra.mxu0 %v955
    %1376 = vmatprep.subr.bf16.mxu0 %v954
    %1377 = vmatpush1.bf16.msra.mxu0 %v953
    %1378 = vmatprep.subr.bf16.mxu0 %v952
    %1379 = vmatpush1.bf16.msra.mxu0 %v951
    %1380 = vmatprep.subr.bf16.mxu0 %v950
    %1381 = vmatpush1.bf16.msra.mxu0 %v949
    %1382 = vmatprep.subr.bf16.mxu0 %v980
    %1383 = vmatpush2.bf16.msra.mxu0 %v979
    %1384 = vmatprep.subr.bf16.mxu0 %v978
    %1385 = vmatpush2.bf16.msra.mxu0 %v977
    %1386 = vmatprep.subr.bf16.mxu0 %v976
    %1387 = vmatpush2.bf16.msra.mxu0 %v975
    %1388 = vmatprep.subr.bf16.mxu0 %v974
    %1389 = vmatpush2.bf16.msra.mxu0 %v973
    %1390 = vmatprep.subr.bf16.mxu0 %v972
    %1391 = vmatpush2.bf16.msra.mxu0 %v971
    %1392 = vmatprep.subr.bf16.mxu0 %v970
    %1393 = vmatpush2.bf16.msra.mxu0 %v969
    %1394 = vmatprep.subr.bf16.mxu0 %v968
    %1395 = vmatpush2.bf16.msra.mxu0 %v967
    %1396 = vmatprep.subr.bf16.mxu0 %v966
    %1397 = vmatpush2.bf16.msra.mxu0 %v965
    %1398 = vmatprep.mubr.bf16.mxu0 %v80
    %1399 = vmatmul.mubr.bf16.gmra.mxu0 %v79
    %v1400 = vpop.f32.mrf.mxu0
    %v1401 = vadd.f32 %v1358, %v1400
    %v1402 = vpop.f32.mrf.mxu0
    %v1403 = vadd.f32 %v1360, %v1402
    %v1404 = vpop.f32.mrf.mxu0
    %v1405 = vadd.f32 %v1362, %v1404
    %v1406 = vpop.f32.mrf.mxu0
    %v1407 = vadd.f32 %v1364, %v1406
    %1408 = vdwg.mxu0
    %1409 = vmatprep.subr.bf16.mxu0 %v996
    %1410 = vmatpush1.bf16.msra.mxu0 %v995
    %1411 = vmatprep.subr.bf16.mxu0 %v994
    %1412 = vmatpush1.bf16.msra.mxu0 %v993
    %1413 = vmatprep.subr.bf16.mxu0 %v992
    %1414 = vmatpush1.bf16.msra.mxu0 %v991
    %1415 = vmatprep.subr.bf16.mxu0 %v990
    %1416 = vmatpush1.bf16.msra.mxu0 %v989
    %1417 = vmatprep.subr.bf16.mxu0 %v988
    %1418 = vmatpush1.bf16.msra.mxu0 %v987
    %1419 = vmatprep.subr.bf16.mxu0 %v986
    %1420 = vmatpush1.bf16.msra.mxu0 %v985
    %1421 = vmatprep.subr.bf16.mxu0 %v984
    %1422 = vmatpush1.bf16.msra.mxu0 %v983
    %1423 = vmatprep.subr.bf16.mxu0 %v982
    %1424 = vmatpush1.bf16.msra.mxu0 %v981
    %1425 = vmatprep.subr.bf16.mxu0 %v1012
    %1426 = vmatpush2.bf16.msra.mxu0 %v1011
    %1427 = vmatprep.subr.bf16.mxu0 %v1010
    %1428 = vmatpush2.bf16.msra.mxu0 %v1009
    %1429 = vmatprep.subr.bf16.mxu0 %v1008
    %1430 = vmatpush2.bf16.msra.mxu0 %v1007
    %1431 = vmatprep.subr.bf16.mxu0 %v1006
    %1432 = vmatpush2.bf16.msra.mxu0 %v1005
    %1433 = vmatprep.subr.bf16.mxu0 %v1004
    %1434 = vmatpush2.bf16.msra.mxu0 %v1003
    %1435 = vmatprep.subr.bf16.mxu0 %v1002
    %1436 = vmatpush2.bf16.msra.mxu0 %v1001
    %1437 = vmatprep.subr.bf16.mxu0 %v1000
    %1438 = vmatpush2.bf16.msra.mxu0 %v999
    %1439 = vmatprep.subr.bf16.mxu0 %v998
    %1440 = vmatpush2.bf16.msra.mxu0 %v997
    %1441 = vmatprep.mubr.bf16.mxu0 %v82
    %1442 = vmatmul.mubr.bf16.gmra.mxu0 %v81
    %v1443 = vpop.f32.mrf.mxu0
    %v1444 = vadd.f32 %v1401, %v1443
    %v1445 = vpop.f32.mrf.mxu0
    %v1446 = vadd.f32 %v1403, %v1445
    %v1447 = vpop.f32.mrf.mxu0
    %v1448 = vadd.f32 %v1405, %v1447
    %v1449 = vpop.f32.mrf.mxu0
    %v1450 = vadd.f32 %v1407, %v1449
    %1451 = vdwg.mxu0
    %1452 = vmatprep.subr.bf16.mxu0 %v1028
    %1453 = vmatpush1.bf16.msra.mxu0 %v1027
    %1454 = vmatprep.subr.bf16.mxu0 %v1026
    %1455 = vmatpush1.bf16.msra.mxu0 %v1025
    %1456 = vmatprep.subr.bf16.mxu0 %v1024
    %1457 = vmatpush1.bf16.msra.mxu0 %v1023
    %1458 = vmatprep.subr.bf16.mxu0 %v1022
    %1459 = vmatpush1.bf16.msra.mxu0 %v1021
    %1460 = vmatprep.subr.bf16.mxu0 %v1020
    %1461 = vmatpush1.bf16.msra.mxu0 %v1019
    %1462 = vmatprep.subr.bf16.mxu0 %v1018
    %1463 = vmatpush1.bf16.msra.mxu0 %v1017
    %1464 = vmatprep.subr.bf16.mxu0 %v1016
    %1465 = vmatpush1.bf16.msra.mxu0 %v1015
    %1466 = vmatprep.subr.bf16.mxu0 %v1014
    %1467 = vmatpush1.bf16.msra.mxu0 %v1013
    %1468 = vmatprep.subr.bf16.mxu0 %v1044
    %1469 = vmatpush2.bf16.msra.mxu0 %v1043
    %1470 = vmatprep.subr.bf16.mxu0 %v1042
    %1471 = vmatpush2.bf16.msra.mxu0 %v1041
    %1472 = vmatprep.subr.bf16.mxu0 %v1040
    %1473 = vmatpush2.bf16.msra.mxu0 %v1039
    %1474 = vmatprep.subr.bf16.mxu0 %v1038
    %1475 = vmatpush2.bf16.msra.mxu0 %v1037
    %1476 = vmatprep.subr.bf16.mxu0 %v1036
    %1477 = vmatpush2.bf16.msra.mxu0 %v1035
    %1478 = vmatprep.subr.bf16.mxu0 %v1034
    %1479 = vmatpush2.bf16.msra.mxu0 %v1033
    %1480 = vmatprep.subr.bf16.mxu0 %v1032
    %1481 = vmatpush2.bf16.msra.mxu0 %v1031
    %1482 = vmatprep.subr.bf16.mxu0 %v1030
    %1483 = vmatpush2.bf16.msra.mxu0 %v1029
    %1484 = vmatprep.mubr.bf16.mxu0 %v84
    %1485 = vmatmul.mubr.bf16.gmra.mxu0 %v83
    %v1486 = vpop.f32.mrf.mxu0
    %v1487 = vadd.f32 %v1444, %v1486
    %v1488 = vpop.f32.mrf.mxu0
    %v1489 = vadd.f32 %v1446, %v1488
    %v1490 = vpop.f32.mrf.mxu0
    %v1491 = vadd.f32 %v1448, %v1490
    %v1492 = vpop.f32.mrf.mxu0
    %v1493 = vadd.f32 %v1450, %v1492
    %1494 = vdwg.mxu0
    %v1495 = vadd.f32 %v45, %v1487
    %v1496 = vadd.f32 %v46, %v1489
    %v1497 = vadd.f32 %v47, %v1491
    %v1498 = vadd.f32 %v48, %v1493
    %1499 = vst [vmem:[%s5] sm:$0xff] %v1495
    %1500 = vst [vmem:[%s5 + $0x8] sm:$0xff] %v1496
    %1501 = vst [vmem:[%s5 + $0x10] sm:$0xff] %v1497
    %1502 = vst [vmem:[%s5 + $0x18] sm:$0xff] %v1498
    // Predicated region
    $region30: #{mlp1_forward.1} parent=1 // pred_check
      %p1503 = pneg %p37
    $region31: #{mlp1_forward.1} parent=1 // pred_check_branch
      %1505 = sbr.rel (%p1503) target = $region33
    $region32: #{mlp1_forward.1} parent=1 // pred_region
      %v1506 = vld [vmem:[%s5] sm:$0xff]
      %v1507 = vld [vmem:[%s5 + $0x8] sm:$0xff]
      %v1508 = vld [vmem:[%s5 + $0x10] sm:$0xff]
      %v1509 = vld [vmem:[%s5 + $0x18] sm:$0xff]
      %v1510 = vld [vmem:[%s2] sm:$0x3]
      %v1512 = vlaneseq
      %v1513 = vshrl.u32 %v1512, 7
      %v1514 = vsub.s32 0, %v1513
      %v1515 = vrot.slane %v1510, %v1514
      %v1516 = vlaneseq
      %v1517 = vshrl.u32 %v1516, 7
      %v1518 = vsub.s32 1, %v1517
      %v1519 = vrot.slane %v1510, %v1518
      %v1522 = vadd.f32 %v1506, %v1515
      %v1523 = vadd.f32 %v1507, %v1519
      %v1524 = vadd.f32 %v1508, %v1515
      %v1525 = vadd.f32 %v1509, %v1519
      %1526 = vst [vmem:[%s5] sm:$0xff] %v1522
      %1527 = vst [vmem:[%s5 + $0x8] sm:$0xff] %v1523
      %1528 = vst [vmem:[%s5 + $0x10] sm:$0xff] %v1524
      %1529 = vst [vmem:[%s5 + $0x18] sm:$0xff] %v1525
      %v1530 = vpack.c.bf16 %v1524, %v1522
      %v1531 = vpack.c.bf16 %v1525, %v1523
      %v1532 = vld [vmem:[%s3] sm:$0xf]
      %v1533 = vld [vmem:[%s3 + $0x4] sm:$0xf]
      %v1534 = vld [vmem:[%s3 + $0x8] sm:$0xf]
      %v1535 = vld [vmem:[%s3 + $0xc] sm:$0xf]
      %v1536 = vld [vmem:[%s3 + $0x10] sm:$0xf]
      %v1537 = vld [vmem:[%s3 + $0x14] sm:$0xf]
      %v1538 = vld [vmem:[%s3 + $0x18] sm:$0xf]
      %v1539 = vld [vmem:[%s3 + $0x1c] sm:$0xf]
      %v1540 = vld [vmem:[%s3 + $0x20] sm:$0xf]
      %v1541 = vld [vmem:[%s3 + $0x24] sm:$0xf]
      %v1542 = vld [vmem:[%s3 + $0x28] sm:$0xf]
      %v1543 = vld [vmem:[%s3 + $0x2c] sm:$0xf]
      %v1544 = vld [vmem:[%s3 + $0x30] sm:$0xf]
      %v1545 = vld [vmem:[%s3 + $0x34] sm:$0xf]
      %v1546 = vld [vmem:[%s3 + $0x38] sm:$0xf]
      %v1547 = vld [vmem:[%s3 + $0x3c] sm:$0xf]
      %v1548 = vld [vmem:[%s3 + $0x40] sm:$0xf]
      %v1549 = vld [vmem:[%s3 + $0x44] sm:$0xf]
      %v1550 = vld [vmem:[%s3 + $0x48] sm:$0xf]
      %v1551 = vld [vmem:[%s3 + $0x4c] sm:$0xf]
      %v1552 = vld [vmem:[%s3 + $0x50] sm:$0xf]
      %v1553 = vld [vmem:[%s3 + $0x54] sm:$0xf]
      %v1554 = vld [vmem:[%s3 + $0x58] sm:$0xf]
      %v1555 = vld [vmem:[%s3 + $0x5c] sm:$0xf]
      %v1556 = vld [vmem:[%s3 + $0x60] sm:$0xf]
      %v1557 = vld [vmem:[%s3 + $0x64] sm:$0xf]
      %v1558 = vld [vmem:[%s3 + $0x68] sm:$0xf]
      %v1559 = vld [vmem:[%s3 + $0x6c] sm:$0xf]
      %v1560 = vld [vmem:[%s3 + $0x70] sm:$0xf]
      %v1561 = vld [vmem:[%s3 + $0x74] sm:$0xf]
      %v1562 = vld [vmem:[%s3 + $0x78] sm:$0xf]
      %v1563 = vld [vmem:[%s3 + $0x7c] sm:$0xf]
      %v1564 = vld [vmem:[%s4] sm:$0x1]
      %v1566 = vlaneseq
      %v1567 = vshrl.u32 %v1566, 7
      %v1568 = vsub.s32 0, %v1567
      %v1569 = vrot.slane %v1564, %v1568
      %v1603 = vunpack.c.l.b16 %v1532
      %v1604 = vunpack.c.l.b16 %v1533
      %v1605 = vunpack.c.l.b16 %v1534
      %v1606 = vunpack.c.l.b16 %v1535
      %v1607 = vunpack.c.l.b16 %v1536
      %v1608 = vunpack.c.l.b16 %v1537
      %v1609 = vunpack.c.l.b16 %v1538
      %v1610 = vunpack.c.l.b16 %v1539
      %v1611 = vunpack.c.l.b16 %v1540
      %v1612 = vunpack.c.l.b16 %v1541
      %v1613 = vunpack.c.l.b16 %v1542
      %v1614 = vunpack.c.l.b16 %v1543
      %v1615 = vunpack.c.l.b16 %v1544
      %v1616 = vunpack.c.l.b16 %v1545
      %v1617 = vunpack.c.l.b16 %v1546
      %v1618 = vunpack.c.l.b16 %v1547
      %v1619 = vunpack.c.l.b16 %v1548
      %v1620 = vunpack.c.l.b16 %v1549
      %v1621 = vunpack.c.l.b16 %v1550
      %v1622 = vunpack.c.l.b16 %v1551
      %v1623 = vunpack.c.l.b16 %v1552
      %v1624 = vunpack.c.l.b16 %v1553
      %v1625 = vunpack.c.l.b16 %v1554
      %v1626 = vunpack.c.l.b16 %v1555
      %v1627 = vunpack.c.l.b16 %v1556
      %v1628 = vunpack.c.l.b16 %v1557
      %v1629 = vunpack.c.l.b16 %v1558
      %v1630 = vunpack.c.l.b16 %v1559
      %v1631 = vunpack.c.l.b16 %v1560
      %v1632 = vunpack.c.l.b16 %v1561
      %v1633 = vunpack.c.l.b16 %v1562
      %v1634 = vunpack.c.l.b16 %v1563
      %v1635 = vpack.c.b16 %v1604, %v1603
      %v1636 = vpack.c.b16 %v1606, %v1605
      %v1637 = vpack.c.b16 %v1608, %v1607
      %v1638 = vpack.c.b16 %v1610, %v1609
      %v1639 = vpack.c.b16 %v1612, %v1611
      %v1640 = vpack.c.b16 %v1614, %v1613
      %v1641 = vpack.c.b16 %v1616, %v1615
      %v1642 = vpack.c.b16 %v1618, %v1617
      %v1643 = vpack.c.b16 %v1620, %v1619
      %v1644 = vpack.c.b16 %v1622, %v1621
      %v1645 = vpack.c.b16 %v1624, %v1623
      %v1646 = vpack.c.b16 %v1626, %v1625
      %v1647 = vpack.c.b16 %v1628, %v1627
      %v1648 = vpack.c.b16 %v1630, %v1629
      %v1649 = vpack.c.b16 %v1632, %v1631
      %v1650 = vpack.c.b16 %v1634, %v1633
      %1667 = vmatprep.subr.bf16.mxu0 0
      %1668 = vmatpush1.bf16.msra.mxu0 %v1642
      %1669 = vmatprep.subr.bf16.mxu0 0
      %1670 = vmatpush1.bf16.msra.mxu0 %v1641
      %1671 = vmatprep.subr.bf16.mxu0 0
      %1672 = vmatpush1.bf16.msra.mxu0 %v1640
      %1673 = vmatprep.subr.bf16.mxu0 0
      %1674 = vmatpush1.bf16.msra.mxu0 %v1639
      %1675 = vmatprep.subr.bf16.mxu0 0
      %1676 = vmatpush1.bf16.msra.mxu0 %v1638
      %1677 = vmatprep.subr.bf16.mxu0 0
      %1678 = vmatpush1.bf16.msra.mxu0 %v1637
      %1679 = vmatprep.subr.bf16.mxu0 0
      %1680 = vmatpush1.bf16.msra.mxu0 %v1636
      %1681 = vmatprep.subr.bf16.mxu0 0
      %1682 = vmatpush1.bf16.msra.mxu0 %v1635
      %1683 = vmatprep.subr.bf16.mxu0 0
      %1684 = vmatpush2.bf16.msra.mxu0 %v1650
      %1685 = vmatprep.subr.bf16.mxu0 0
      %1686 = vmatpush2.bf16.msra.mxu0 %v1649
      %1687 = vmatprep.subr.bf16.mxu0 0
      %1688 = vmatpush2.bf16.msra.mxu0 %v1648
      %1689 = vmatprep.subr.bf16.mxu0 0
      %1690 = vmatpush2.bf16.msra.mxu0 %v1647
      %1691 = vmatprep.subr.bf16.mxu0 0
      %1692 = vmatpush2.bf16.msra.mxu0 %v1646
      %1693 = vmatprep.subr.bf16.mxu0 0
      %1694 = vmatpush2.bf16.msra.mxu0 %v1645
      %1695 = vmatprep.subr.bf16.mxu0 0
      %1696 = vmatpush2.bf16.msra.mxu0 %v1644
      %1697 = vmatprep.subr.bf16.mxu0 0
      %1698 = vmatpush2.bf16.msra.mxu0 %v1643
      %1699 = vmatprep.mubr.bf16.mxu0 %v1531
      %1700 = vmatmul.mubr.bf16.gmra.mxu0 %v1530
      %v1701 = vpop.f32.mrf.mxu0
      %v1702 = vadd.f32 %v1569, %v1701
      %v1703 = vpop.f32.mrf.mxu0
      %v1704 = vpop.f32.mrf.mxu0
      %v1705 = vadd.f32 %v1569, %v1704
      %v1706 = vpop.f32.mrf.mxu0
      %1707 = vdwg.mxu0
      %1708 = vst [vmem:[%s6] sm:$0xff] %v1702
      %1709 = vst [vmem:[%s6 + $0x8] sm:$0xff] %v1705
    $region33: #{mlp1_forward.1} parent=1 // pred_fallthru
      _
    // Predicated region
    $region34: #{mlp1_forward.1} parent=1 // pred_check
      _
    $region35: #{mlp1_forward.1} parent=1 // pred_check_branch
      %1711 = sbr.rel (0) target = $region37
    $region36: #{mlp1_forward.1} parent=1 // pred_region
      _
    $region37: #{mlp1_forward.1} parent=1 // pred_fallthru
      _
    // Predicated region
    $region38: #{mlp1_forward.1} parent=1 // pred_check
      _
    $region39: #{mlp1_forward.1} parent=1 // pred_check_branch
      %1713 = sbr.rel (0) target = $region41
    $region40: #{mlp1_forward.1} parent=1 // pred_region
      _
    $region41: #{mlp1_forward.1} parent=1 // pred_fallthru
      _
    // Predicated region
    $region42: #{mlp1_forward.1} parent=1 // pred_check
      _
    $region43: #{mlp1_forward.1} parent=1 // pred_check_branch
      %1715 = sbr.rel (0) target = $region45
    $region44: #{mlp1_forward.1} parent=1 // pred_region
      _
    $region45: #{mlp1_forward.1} parent=1 // pred_fallthru
      _
    // Predicated region
    $region46: #{mlp1_forward.1} parent=1 // pred_check
      _
    $region47: #{mlp1_forward.1} parent=1 // pred_check_branch
      %1717 = sbr.rel (0) target = $region49
    $region48: #{mlp1_forward.1} parent=1 // pred_region
      _
    $region49: #{mlp1_forward.1} parent=1 // pred_fallthru
      _
    %1718 = vsyncpa [#allocation3], 1

</llo_original>
